<compile_context>
chip_gen: v7x
topology: tpu7x:2x2x1
jax: 0.10.0
libtpu: 0.0.40
codegen_flags: <defaults>
</compile_context>

<pallas_src>
import jax
import jax.numpy as jnp
from jax import lax
from jax.experimental import pallas as pl
from jax.experimental.pallas import tpu as pltpu


def _round_up(x: int, m: int) -> int:
    return ((x + m - 1) // m) * m


def _dir_pcapass_kernel(adj_ref, x_hbm, w_ref, out_ref,
                        x_vmem, x_sem, fwd_acc, bwd_acc):
    i = pl.program_id(0)            # dst-row block
    j = pl.program_id(1)            # src-col block (reduction axis for fwd)
    ni = pl.num_programs(0)
    nj = pl.num_programs(1)

    T = adj_ref.shape[0]
    Fa = x_vmem.shape[1]            # 1 (ones col) + F feats + pad, multiple of 8

    row_i = pl.multiple_of(i * T, 128)
    row_j = pl.multiple_of(j * T, 128)

    # One-time setup: pull the (ones | feat) matrix into a SINGLE VMEM buffer
    # and zero the resident output (it stays in VMEM for the whole grid).
    @pl.when(jnp.logical_and(i == 0, j == 0))
    def _():
        cp = pltpu.make_async_copy(x_hbm, x_vmem, x_sem.at[0])
        cp.start()
        cp.wait()
        out_ref[...] = jnp.zeros_like(out_ref)

    adj = adj_ref[...]                                   # (T, T) bf16, straight to MXU
    x_dst = x_vmem[pl.ds(row_i, T), :]                   # (T, Fa) bf16
    x_src = x_vmem[pl.ds(row_j, T), :]                   # (T, Fa) bf16

    # ---- forward direction: in-neighbour sums of dst block i (reduce over j).
    # Column 0 of x is all-ones, so column 0 of f_part is the in-degree.
    f_part = jnp.dot(adj, x_src, preferred_element_type=jnp.float32)     # (T, Fa) f32

    @pl.when(j == 0)
    def _():
        fwd_acc[...] = f_part

    @pl.when(j > 0)
    def _():
        fwd_acc[...] += f_part

    # ---- backward direction: out-neighbour sums of src block j (reduce over i).
    # A^T @ x without materialising a transpose; column 0 is the out-degree.
    b_part = lax.dot_general(adj, x_dst, (((0,), (0,)), ((), ())),
                             preferred_element_type=jnp.float32)         # (T, Fa) f32

    @pl.when(i == 0)
    def _():
        bwd_acc[pl.ds(row_j, T), :] = b_part

    @pl.when(i > 0)
    def _():
        bwd_acc[pl.ds(row_j, T), :] += b_part

    # ---- finalise self + forward terms for dst block i at its last j step.
    @pl.when(j == nj - 1)
    def _():
        acc = fwd_acc[...]
        deg = acc[:, 0:1]
        inv = jnp.where(deg > 0, 1.0 / jnp.maximum(deg, 1.0), 0.0)
        fwd_neigh = acc * inv                                            # f32
        w_self = w_ref[0:Fa, :]             # row 0 / pad rows are zero
        w_fwd = w_ref[Fa:2 * Fa, :]
        part = (jnp.dot(x_dst.astype(jnp.float32), w_self,
                        preferred_element_type=jnp.float32)
                + jnp.dot(fwd_neigh, w_fwd,
                          preferred_element_type=jnp.float32))
        out_ref[pl.ds(row_i, T), :] += part

    # ---- finalise backward term for src block j at its last i step.
    @pl.when(i == ni - 1)
    def _():
        accb = bwd_acc[pl.ds(row_j, T), :]
        deg = accb[:, 0:1]
        inv = jnp.where(deg > 0, 1.0 / jnp.maximum(deg, 1.0), 0.0)
        bwd_neigh = accb * inv
        w_bwd = w_ref[2 * Fa:3 * Fa, :]
        out_ref[pl.ds(row_j, T), :] += jnp.dot(
            bwd_neigh, w_bwd, preferred_element_type=jnp.float32)


def dir_pcapass_conv(adj, feat, weight, *, tile=1024):
    """DirPCAPassConv forward on a dense adjacency.

    adj    : [N, N] dense adjacency, adj[dst, src] = 1 iff edge src -> dst.
             Entries must be exactly representable in bf16 (0/1 adjacency).
    feat   : [N, F] node features.
    weight : [OUT, 3F] fc_self_neigh weight (PyTorch Linear layout).
    """
    N, F = feat.shape
    OUT, three_f = weight.shape
    assert three_f == 3 * F, "weight must be [out_feats, 3 * in_feats]"
    assert adj.shape == (N, N)
    assert tile % 128 == 0, "tile must be a multiple of 128"

    T = min(tile, _round_up(N, 128))     # 128-aligned adjacency tile
    Np = _round_up(N, T)
    OUTP = _round_up(OUT, 128)           # lane-dense output width
    Fa = _round_up(F + 1, 8)             # ones column + feats, 8-aligned
    n_blk = Np // T

    # Adjacency stored in bf16 (exact for 0/1).  Skip the extra HBM round trip
    # when the caller already supplies a bf16, tile-aligned adjacency.
    if adj.dtype == jnp.bfloat16 and N == Np:
        adj_p = adj
    else:
        adj_p = jnp.zeros((Np, Np), jnp.bfloat16).at[:N, :N].set(
            adj.astype(jnp.bfloat16))

    # Features with a leading ones column (degrees fall out of the matmuls),
    # stored in bf16 for the MXU; all accumulation remains f32 in-kernel.
    x_p = jnp.zeros((Np, Fa), jnp.bfloat16)
    x_p = x_p.at[:N, 0].set(jnp.ones((N,), jnp.bfloat16))
    x_p = x_p.at[:N, 1:F + 1].set(feat.astype(jnp.bfloat16))

    # Weight, pre-transposed, split into 3 row blocks of Fa rows each whose
    # row 0 (ones-column slot) and padding rows are zero.
    w_t = jnp.transpose(weight).astype(jnp.float32)          # (3F, OUT)
    w_p = jnp.zeros((3 * Fa, OUTP), jnp.float32)
    w_p = w_p.at[1:F + 1, :OUT].set(w_t[0:F])                # self
    w_p = w_p.at[Fa + 1:Fa + F + 1, :OUT].set(w_t[F:2 * F])  # fwd
    w_p = w_p.at[2 * Fa + 1:2 * Fa + F + 1, :OUT].set(w_t[2 * F:3 * F])  # bwd

    # VMEM footprint (lane-padded) + headroom -> per-call limit.
    vmem_bytes = (2 * T * T * 2                     # adj double buffer (bf16)
                  + 2 * Np * OUTP * 4               # resident output (2 bufs)
                  + 2 * 3 * Fa * OUTP * 4           # weight (2 bufs)
                  + Np * 128 * 2                    # x scratch (bf16, lane pad)
                  + T * 128 * 4                     # fwd accumulator
                  + Np * 128 * 4)                   # bwd accumulator
    vmem_limit = int(min(max(vmem_bytes + (8 << 20), 32 << 20), 100 << 20))

    flops = int(4 * Np * Np * Fa + 6 * Np * Fa * OUTP)
    bytes_accessed = int(Np * Np * 2 + Np * Fa * 2
                         + 3 * Fa * OUTP * 4 + Np * OUTP * 4)

    out_p = pl.pallas_call(
        _dir_pcapass_kernel,
        out_shape=jax.ShapeDtypeStruct((Np, OUTP), jnp.float32),
        grid_spec=pltpu.PrefetchScalarGridSpec(
            num_scalar_prefetch=0,
            grid=(n_blk, n_blk),
            in_specs=[
                # adjacency tile: streamed (double-buffered) once per (i, j)
                pl.BlockSpec((T, T), lambda i, j: (i, j)),
                # node features stay in HBM; copied ONCE to a VMEM scratch
                pl.BlockSpec(memory_space=pl.ANY),
                # fc_self_neigh weight (pre-transposed, OUT padded to 128)
                pl.BlockSpec((3 * Fa, OUTP), lambda i, j: (0, 0)),
            ],
            # whole lane-dense output resident in VMEM, written back once
            out_specs=pl.BlockSpec((Np, OUTP), lambda i, j: (0, 0)),
            scratch_shapes=[
                pltpu.VMEM((Np, Fa), jnp.bfloat16),   # resident features
                pltpu.SemaphoreType.DMA((1,)),        # feature-copy semaphore
                pltpu.VMEM((T, Fa), jnp.float32),     # fwd accumulator (dst block)
                pltpu.VMEM((Np, Fa), jnp.float32),    # bwd accumulator (all src rows)
            ],
        ),
        compiler_params=pltpu.CompilerParams(
            # Both axes carry grid-persistent accumulators (this is what lets
            # each adjacency tile be read exactly once) => neither is parallel.
            dimension_semantics=("arbitrary", "arbitrary"),
            vmem_limit_bytes=vmem_limit,
        ),
        cost_estimate=pl.CostEstimate(
            flops=flops, transcendentals=0, bytes_accessed=bytes_accessed),
    )(adj_p, x_p, w_p)

    return out_p[:N, :OUT]


def _reference(adj, feat, weight):
    adj = adj.astype(jnp.float32)
    feat = feat.astype(jnp.float32)
    in_deg = jnp.sum(adj, axis=1, keepdims=True)
    out_deg = jnp.sum(adj, axis=0)[:, None]
    fwd = jnp.where(in_deg > 0, (adj @ feat) / jnp.maximum(in_deg, 1.0), 0.0)
    bwd = jnp.where(out_deg > 0, (adj.T @ feat) / jnp.maximum(out_deg, 1.0), 0.0)
    cat = jnp.concatenate([feat, fwd, bwd], axis=1)
    return cat @ jnp.transpose(weight).astype(jnp.float32)


if __name__ == "__main__":
    key = jax.random.PRNGKey(0)
    k_adj, k_feat, k_w = jax.random.split(key, 3)

    N = 200          # nodes (padded to 256 inside the wrapper)
    IN_FEATS = 32    # in_feats
    OUT_FEATS = 48   # out_feats (padded to 128-lane output inside the wrapper)

    # Deterministic random directed graph (some nodes may have zero in/out degree).
    adj = (jax.random.uniform(k_adj, (N, N)) < 0.1).astype(jnp.float32)
    feat = jax.random.normal(k_feat, (N, IN_FEATS), dtype=jnp.float32)
    # fc_self_neigh: Linear(3*in_feats -> out_feats, bias=False).
    weight = jax.random.normal(k_w, (OUT_FEATS, 3 * IN_FEATS), dtype=jnp.float32) * 0.05

    # tile=128 -> padded N=256, 2x2 grid: exercises tiling, accumulators, padding.
    out = dir_pcapass_conv(adj, feat, weight, tile=128)
    out = jax.block_until_ready(out)

    ref = _reference(adj, feat, weight)
    assert out.shape == (N, OUT_FEATS)
    max_err = jnp.max(jnp.abs(out - ref))
    # Features feed the MXU in bf16 (adjacency/degrees stay exact), so allow
    # ~1e-2 absolute tolerance vs the f32 reference.
    assert jnp.allclose(out, ref, atol=2e-2, rtol=2e-2), (
        f"mismatch vs reference (max abs err {max_err})")

    print("KERNEL_OK")
</pallas_src>

<mosaic_0001>
module attributes {stable_mosaic.version = 11 : i64} {
  func.func @_dir_pcapass_kernel(%arg0: i32, %arg1: i32, %arg2: memref<128x128xbf16, #tpu.memory_space<vmem>>, %arg3: memref<256x40xbf16, #tpu.memory_space<any>>, %arg4: memref<120x128xf32, #tpu.memory_space<vmem>>, %arg5: memref<256x128xf32, #tpu.memory_space<vmem>>, %arg6: memref<256x40xbf16, #tpu.memory_space<vmem>>, %arg7: memref<1x!tpu.dma_semaphore, #tpu.memory_space<semaphore_mem>>, %arg8: memref<128x40xf32, #tpu.memory_space<vmem>>, %arg9: memref<256x40xf32, #tpu.memory_space<vmem>>) attributes {dimension_semantics = [#tpu.dimension_semantics<arbitrary>, #tpu.dimension_semantics<arbitrary>], iteration_bounds = array<i64: 2, 2>, scalar_prefetch = 0 : i64, scratch_operands = 4 : i64, tpu.core_type = #tpu.core_type<tc>, window_params = [{transform_indices = @transform_0, window_bounds = array<i64: 128, 128>}, {}, {pipeline_mode = #tpu.pipeline_mode<synchronous>, transform_indices = @transform_2, window_bounds = array<i64: 120, 128>}, {pipeline_mode = #tpu.pipeline_mode<synchronous>, transform_indices = @transform_3, window_bounds = array<i64: 256, 128>}]} {
    %c128_i32 = arith.constant 128 : i32
    %0 = arith.muli %arg0, %c128_i32 : i32
    %1 = tpu.assume_multiple %0, 128 : i32
    %c128_i32_0 = arith.constant 128 : i32
    %2 = arith.muli %arg1, %c128_i32_0 : i32
    %3 = tpu.assume_multiple %2, 128 : i32
    %c0_i32 = arith.constant 0 : i32
    %4 = arith.cmpi eq, %arg0, %c0_i32 : i32
    %c0_i32_1 = arith.constant 0 : i32
    %5 = arith.cmpi eq, %arg1, %c0_i32_1 : i32
    %6 = arith.andi %4, %5 : i1
    %7 = arith.extui %6 : i1 to i32
    %c0_i32_2 = arith.constant 0 : i32
    %8 = arith.cmpi ne, %7, %c0_i32_2 : i32
    scf.if %8 {
      %c0_i32_18 = arith.constant 0 : i32
      %34 = tpu.memref_slice %arg7[%c0_i32_18] : memref<1x!tpu.dma_semaphore, #tpu.memory_space<semaphore_mem>> -> memref<1x!tpu.dma_semaphore, #tpu.memory_space<semaphore_mem>>
      %35 = tpu.memref_squeeze %34 : memref<1x!tpu.dma_semaphore, #tpu.memory_space<semaphore_mem>> -> memref<!tpu.dma_semaphore, #tpu.memory_space<semaphore_mem>>
      tpu.enqueue_dma source(%arg3 : memref<256x40xbf16, #tpu.memory_space<any>>) target(%arg6 : memref<256x40xbf16, #tpu.memory_space<vmem>>) target_semaphore(%35 : memref<!tpu.dma_semaphore, #tpu.memory_space<semaphore_mem>>)
      %c0_i32_19 = arith.constant 0 : i32
      %36 = tpu.memref_slice %arg7[%c0_i32_19] : memref<1x!tpu.dma_semaphore, #tpu.memory_space<semaphore_mem>> -> memref<1x!tpu.dma_semaphore, #tpu.memory_space<semaphore_mem>>
      %37 = tpu.memref_squeeze %36 : memref<1x!tpu.dma_semaphore, #tpu.memory_space<semaphore_mem>> -> memref<!tpu.dma_semaphore, #tpu.memory_space<semaphore_mem>>
      tpu.wait_dma2 semaphore(%37 : memref<!tpu.dma_semaphore, #tpu.memory_space<semaphore_mem>>) src(%arg3 : memref<256x40xbf16, #tpu.memory_space<any>>) dst(%arg6 : memref<256x40xbf16, #tpu.memory_space<vmem>>)
      %cst_20 = arith.constant 0.000000e+00 : f32
      %38 = vector.broadcast %cst_20 : f32 to vector<256x128xf32>
      %c0_21 = arith.constant 0 : index
      %c0_22 = arith.constant 0 : index
      %39 = vector.load %arg5[%c0_21, %c0_22] : memref<256x128xf32, #tpu.memory_space<vmem>>, vector<256x128xf32>
      tpu.vector_store %arg5[%c0_21, %c0_22], %38 {strides = array<i32>} : memref<256x128xf32, #tpu.memory_space<vmem>>, vector<256x128xf32>,
    } else {
    }
    %c0 = arith.constant 0 : index
    %c0_3 = arith.constant 0 : index
    %9 = vector.load %arg2[%c0, %c0_3] : memref<128x128xbf16, #tpu.memory_space<vmem>>, vector<128x128xbf16>
    %10 = arith.index_cast %1 : i32 to index
    %c0_4 = arith.constant 0 : index
    %11 = vector.load %arg6[%10, %c0_4] : memref<256x40xbf16, #tpu.memory_space<vmem>>, vector<128x40xbf16>
    %12 = arith.index_cast %3 : i32 to index
    %c0_5 = arith.constant 0 : index
    %13 = vector.load %arg6[%12, %c0_5] : memref<256x40xbf16, #tpu.memory_space<vmem>>, vector<128x40xbf16>
    %cst = arith.constant dense<0.000000e+00> : vector<128x40xf32>
    %14 = tpu.matmul %9, %13, %cst {dimension_numbers = #tpu.dot_dimension_numbers<[1], [0], [0], [1], [0, 0, 1, 1], [], []>} : vector<128x128xbf16>, vector<128x40xbf16>, vector<128x40xf32> -> vector<128x40xf32>
    %c0_i32_6 = arith.constant 0 : i32
    %15 = arith.cmpi eq, %arg1, %c0_i32_6 : i32
    %16 = arith.extui %15 : i1 to i32
    %c0_i32_7 = arith.constant 0 : i32
    %17 = arith.cmpi ne, %16, %c0_i32_7 : i32
    scf.if %17 {
      %c0_18 = arith.constant 0 : index
      %c0_19 = arith.constant 0 : index
      %34 = vector.load %arg8[%c0_18, %c0_19] : memref<128x40xf32, #tpu.memory_space<vmem>>, vector<128x40xf32>
      tpu.vector_store %arg8[%c0_18, %c0_19], %14 {strides = array<i32>} : memref<128x40xf32, #tpu.memory_space<vmem>>, vector<128x40xf32>,
    } else {
    }
    %c0_i32_8 = arith.constant 0 : i32
    %18 = arith.cmpi sgt, %arg1, %c0_i32_8 : i32
    %19 = arith.extui %18 : i1 to i32
    %c0_i32_9 = arith.constant 0 : i32
    %20 = arith.cmpi ne, %19, %c0_i32_9 : i32
    scf.if %20 {
      %c0_18 = arith.constant 0 : index
      %c0_19 = arith.constant 0 : index
      %34 = vector.load %arg8[%c0_18, %c0_19] : memref<128x40xf32, #tpu.memory_space<vmem>>, vector<128x40xf32>
      %35 = arith.addf %34, %14 : vector<128x40xf32>
      %c0_20 = arith.constant 0 : index
      %c0_21 = arith.constant 0 : index
      %36 = vector.load %arg8[%c0_20, %c0_21] : memref<128x40xf32, #tpu.memory_space<vmem>>, vector<128x40xf32>
      tpu.vector_store %arg8[%c0_20, %c0_21], %35 {strides = array<i32>} : memref<128x40xf32, #tpu.memory_space<vmem>>, vector<128x40xf32>,
    } else {
    }
    %cst_10 = arith.constant dense<0.000000e+00> : vector<128x40xf32>
    %21 = tpu.matmul %9, %11, %cst_10 {dimension_numbers = #tpu.dot_dimension_numbers<[0], [0], [1], [1], [0, 1, 1, 1], [], []>} : vector<128x128xbf16>, vector<128x40xbf16>, vector<128x40xf32> -> vector<128x40xf32>
    %c0_i32_11 = arith.constant 0 : i32
    %22 = arith.cmpi eq, %arg0, %c0_i32_11 : i32
    %23 = arith.extui %22 : i1 to i32
    %c0_i32_12 = arith.constant 0 : i32
    %24 = arith.cmpi ne, %23, %c0_i32_12 : i32
    scf.if %24 {
      %34 = arith.index_cast %3 : i32 to index
      %c0_18 = arith.constant 0 : index
      %35 = vector.load %arg9[%34, %c0_18] : memref<256x40xf32, #tpu.memory_space<vmem>>, vector<128x40xf32>
      tpu.vector_store %arg9[%34, %c0_18], %21 {strides = array<i32>} : memref<256x40xf32, #tpu.memory_space<vmem>>, vector<128x40xf32>,
    } else {
    }
    %c0_i32_13 = arith.constant 0 : i32
    %25 = arith.cmpi sgt, %arg0, %c0_i32_13 : i32
    %26 = arith.extui %25 : i1 to i32
    %c0_i32_14 = arith.constant 0 : i32
    %27 = arith.cmpi ne, %26, %c0_i32_14 : i32
    scf.if %27 {
      %34 = arith.index_cast %3 : i32 to index
      %c0_18 = arith.constant 0 : index
      %35 = vector.load %arg9[%34, %c0_18] : memref<256x40xf32, #tpu.memory_space<vmem>>, vector<128x40xf32>
      %36 = arith.addf %35, %21 : vector<128x40xf32>
      %37 = arith.index_cast %3 : i32 to index
      %c0_19 = arith.constant 0 : index
      %38 = vector.load %arg9[%37, %c0_19] : memref<256x40xf32, #tpu.memory_space<vmem>>, vector<128x40xf32>
      tpu.vector_store %arg9[%37, %c0_19], %36 {strides = array<i32>} : memref<256x40xf32, #tpu.memory_space<vmem>>, vector<128x40xf32>,
    } else {
    }
    %c1_i32 = arith.constant 1 : i32
    %28 = arith.cmpi eq, %arg1, %c1_i32 : i32
    %29 = arith.extui %28 : i1 to i32
    %c0_i32_15 = arith.constant 0 : i32
    %30 = arith.cmpi ne, %29, %c0_i32_15 : i32
    scf.if %30 {
      %c0_18 = arith.constant 0 : index
      %c0_19 = arith.constant 0 : index
      %34 = vector.load %arg8[%c0_18, %c0_19] : memref<128x40xf32, #tpu.memory_space<vmem>>, vector<128x40xf32>
      %35 = vector.extract_strided_slice %34 {offsets = [0, 0], sizes = [128, 1], strides = [1, 1]} : vector<128x40xf32> to vector<128x1xf32>
      %cst_20 = arith.constant 0.000000e+00 : f32
      %36 = vector.broadcast %cst_20 : f32 to vector<128x1xf32>
      %37 = arith.cmpf ogt, %35, %36 : vector<128x1xf32>
      %cst_21 = arith.constant 1.000000e+00 : f32
      %38 = vector.broadcast %cst_21 : f32 to vector<128x1xf32>
      %39 = arith.maximumf %35, %38 : vector<128x1xf32>
      %cst_22 = arith.constant 1.000000e+00 : f32
      %40 = vector.broadcast %cst_22 : f32 to vector<128x1xf32>
      %41 = arith.divf %40, %39 : vector<128x1xf32>
      %cst_23 = arith.constant 0.000000e+00 : f32
      %42 = vector.broadcast %cst_23 : f32 to vector<128x1xf32>
      %43 = arith.select %37, %41, %42 : vector<128x1xi1>, vector<128x1xf32>
      %44 = vector.broadcast %43 : vector<128x1xf32> to vector<128x40xf32>
      %45 = arith.mulf %34, %44 : vector<128x40xf32>
      %c0_24 = arith.constant 0 : index
      %c0_25 = arith.constant 0 : index
      %46 = vector.load %arg4[%c0_24, %c0_25] : memref<120x128xf32, #tpu.memory_space<vmem>>, vector<40x128xf32>
      %c40 = arith.constant 40 : index
      %c0_26 = arith.constant 0 : index
      %47 = vector.load %arg4[%c40, %c0_26] : memref<120x128xf32, #tpu.memory_space<vmem>>, vector<40x128xf32>
      %48 = arith.extf %11 : vector<128x40xbf16> to vector<128x40xf32>
      %cst_27 = arith.constant dense<0.000000e+00> : vector<128x128xf32>
      %49 = tpu.matmul %48, %46, %cst_27 {dimension_numbers = #tpu.dot_dimension_numbers<[1], [0], [0], [1], [0, 0, 1, 1], [], []>} : vector<128x40xf32>, vector<40x128xf32>, vector<128x128xf32> -> vector<128x128xf32>
      %cst_28 = arith.constant dense<0.000000e+00> : vector<128x128xf32>
      %50 = tpu.matmul %45, %47, %cst_28 {dimension_numbers = #tpu.dot_dimension_numbers<[1], [0], [0], [1], [0, 0, 1, 1], [], []>} : vector<128x40xf32>, vector<40x128xf32>, vector<128x128xf32> -> vector<128x128xf32>
      %51 = arith.addf %49, %50 : vector<128x128xf32>
      %52 = arith.index_cast %1 : i32 to index
      %c0_29 = arith.constant 0 : index
      %53 = vector.load %arg5[%52, %c0_29] : memref<256x128xf32, #tpu.memory_space<vmem>>, vector<128x128xf32>
      %54 = arith.addf %53, %51 : vector<128x128xf32>
      %55 = arith.index_cast %1 : i32 to index
      %c0_30 = arith.constant 0 : index
      %56 = vector.load %arg5[%55, %c0_30] : memref<256x128xf32, #tpu.memory_space<vmem>>, vector<128x128xf32>
      tpu.vector_store %arg5[%55, %c0_30], %54 {strides = array<i32>} : memref<256x128xf32, #tpu.memory_space<vmem>>, vector<128x128xf32>,
    } else {
    }
    %c1_i32_16 = arith.constant 1 : i32
    %31 = arith.cmpi eq, %arg0, %c1_i32_16 : i32
    %32 = arith.extui %31 : i1 to i32
    %c0_i32_17 = arith.constant 0 : i32
    %33 = arith.cmpi ne, %32, %c0_i32_17 : i32
    scf.if %33 {
      %34 = arith.index_cast %3 : i32 to index
      %c0_18 = arith.constant 0 : index
      %35 = vector.load %arg9[%34, %c0_18] : memref<256x40xf32, #tpu.memory_space<vmem>>, vector<128x40xf32>
      %36 = vector.extract_strided_slice %35 {offsets = [0, 0], sizes = [128, 1], strides = [1, 1]} : vector<128x40xf32> to vector<128x1xf32>
      %cst_19 = arith.constant 0.000000e+00 : f32
      %37 = vector.broadcast %cst_19 : f32 to vector<128x1xf32>
      %38 = arith.cmpf ogt, %36, %37 : vector<128x1xf32>
      %cst_20 = arith.constant 1.000000e+00 : f32
      %39 = vector.broadcast %cst_20 : f32 to vector<128x1xf32>
      %40 = arith.maximumf %36, %39 : vector<128x1xf32>
      %cst_21 = arith.constant 1.000000e+00 : f32
      %41 = vector.broadcast %cst_21 : f32 to vector<128x1xf32>
      %42 = arith.divf %41, %40 : vector<128x1xf32>
      %cst_22 = arith.constant 0.000000e+00 : f32
      %43 = vector.broadcast %cst_22 : f32 to vector<128x1xf32>
      %44 = arith.select %38, %42, %43 : vector<128x1xi1>, vector<128x1xf32>
      %45 = vector.broadcast %44 : vector<128x1xf32> to vector<128x40xf32>
      %46 = arith.mulf %35, %45 : vector<128x40xf32>
      %c80 = arith.constant 80 : index
      %c0_23 = arith.constant 0 : index
      %47 = vector.load %arg4[%c80, %c0_23] : memref<120x128xf32, #tpu.memory_space<vmem>>, vector<40x128xf32>
      %48 = arith.index_cast %3 : i32 to index
      %c0_24 = arith.constant 0 : index
      %49 = vector.load %arg5[%48, %c0_24] : memref<256x128xf32, #tpu.memory_space<vmem>>, vector<128x128xf32>
      %cst_25 = arith.constant dense<0.000000e+00> : vector<128x128xf32>
      %50 = tpu.matmul %46, %47, %cst_25 {dimension_numbers = #tpu.dot_dimension_numbers<[1], [0], [0], [1], [0, 0, 1, 1], [], []>} : vector<128x40xf32>, vector<40x128xf32>, vector<128x128xf32> -> vector<128x128xf32>
      %51 = arith.addf %49, %50 : vector<128x128xf32>
      %52 = arith.index_cast %3 : i32 to index
      %c0_26 = arith.constant 0 : index
      %53 = vector.load %arg5[%52, %c0_26] : memref<256x128xf32, #tpu.memory_space<vmem>>, vector<128x128xf32>
      tpu.vector_store %arg5[%52, %c0_26], %51 {strides = array<i32>} : memref<256x128xf32, #tpu.memory_space<vmem>>, vector<128x128xf32>,
    } else {
    }
    return
  }
  func.func @transform_0(%arg0: i32, %arg1: i32) -> (i32, i32) {
    %c0_i32 = arith.constant 0 : i32
    return %arg0, %arg1 : i32, i32
  }
  func.func @transform_2(%arg0: i32, %arg1: i32) -> (i32, i32) {
    %c0_i32 = arith.constant 0 : i32
    %c0_i32_0 = arith.constant 0 : i32
    %c0_i32_1 = arith.constant 0 : i32
    return %c0_i32, %c0_i32_0 : i32, i32
  }
  func.func @transform_3(%arg0: i32, %arg1: i32) -> (i32, i32) {
    %c0_i32 = arith.constant 0 : i32
    %c0_i32_0 = arith.constant 0 : i32
    %c0_i32_1 = arith.constant 0 : i32
    return %c0_i32, %c0_i32_0 : i32, i32
  }
}

</mosaic_0001>

<llo_original>
// kernel: tpu_custom_call.1
$region0: #{tpu_custom_call.1}
  #allocation0 [shape = 'u32[]', space=smem, size = 0x4, offset = 0x4, fixed_abs, tag = 'smem constant byte address 0x4 - core index']
  #allocation1 [shape = 'u32[144,128]{1,0:T(1,128)}', space=vmem, size = 0x12000, scoped, tag = 'internal scratch']
  #allocation2 [shape = 'bf16[256,40]{1,0:T(16,128)(2,1)}', space=vmem, size = 0x10000, scoped, tag = 'scratch operand']
  #allocation3 [shape = 's32[1]{0}', space=sflag, size = 0x4, scoped, tag = 'scratch operand']
  #allocation4 [shape = 'f32[128,40]{1,0:T(8,128)}', space=vmem, size = 0x10000, scoped, tag = 'scratch operand']
  #allocation5 [shape = 'f32[256,40]{1,0:T(8,128)}', space=vmem, size = 0x20000, scoped, tag = 'scratch operand']
  #allocation10 [shape = 's32[]', space=sflag, size = 0x4, offset = 0, fixed_abs, tag = 'sflag constant byte address 0x0 - dummy sync flag']
  %s0 = inlined_call_operand.hbm [shape: bf16[256,256], index: 0, kind: input, shape index: {}]
  %s1 = inlined_call_operand.vmem [shape: bf16[256,40], index: 1, kind: input, shape index: {}]
  %s2 = inlined_call_operand.vmem [shape: f32[120,128], index: 2, kind: input, shape index: {}]
  %s3 = inlined_call_operand.hbm [shape: f32[256,128], index: 3, kind: output, shape index: {}]
  %s4 = sld [smem:[#allocation0]]
  $region107: #{tpu_custom_call.1} parent=0
    _
  %s6 = ssub.s32 1, %s4
  %s7 = scalar_select 0, %s6, %s4
  $region1: #{tpu_custom_call.1} parent=0
    #allocation6 [shape = 'u8[65536]{0}', space=vmem, size = 0x10000, scoped, tag = 'input window, operand 0']
    #allocation7 [shape = 's32[2]{0}', space=sflag, size = 0x8, scoped, tag = 'scoped memory for tpu_custom_call.1']
    #allocation8 [shape = 's32[2]{0}', space=sflag, size = 0x8, scoped, tag = 'scoped memory for tpu_custom_call.1']
    #allocation9 [shape = 'u8[131072]{0}', space=vmem, size = 0x20000, scoped, tag = 'output window, operand 0, single buffered']
    %8 = vsyncpa [#allocation7], 0
    %s9 = scalar_lea.sflag [#allocation7], 1
    %10 = vsyncpa %s9, 0
    %11 = vsyncpa [#allocation8], 0
    loop: start=0, step=1, limit=6
    $region2: #{tpu_custom_call.1} parent=1 // loop_pre_header
      _
    $region3: #{tpu_custom_call.1} parent=1 // loop_header
      %s13 = sphi 0, %s17
      %p14 = scmp.ge.s32.totalorder %s13, 6
      %s20 = sphi 0, %s32
      %s21 = sphi 0, %s28
      %s22 = sphi 0, %s20
      %s23 = sphi 0, %s21
      %s24 = sphi 0, %s22
      %s25 = sphi 0, %s23
      %s37 = sphi 0, %s39
      %s40 = sphi 0, %s37
      %s41 = sphi 0, %s40
      %s57 = sphi 0, %s41
      %s61 = sphi 0, %s61
      %s63 = sphi 0, %s61
      %s64 = sphi 0, %s63
      %s78 = sphi 0, %s64
      %s82 = sphi 0, %s82
      %s84 = sphi 0, %s82
      %s85 = sphi 0, %s84
      %s99 = sphi 0, %s85
    $region4: #{tpu_custom_call.1} parent=1 // loop_header_branch
      %16 = sbr.rel (%p14) target = $region8
    $region5: #{tpu_custom_call.1} parent=1 // loop_body
      %s18 = ssub.s32 %s13, 1
      %s19 = ssub.s32 %s13, 2
      %s26 = sadd.s32 1, %s21
      %p27 = scmp.ge.s32.totalorder %s26, 2
      %s28 = scalar_select %p27, 0, %s26
      %s29 = sadd.s32 1, %s20
      %s30 = scalar_select %p27, %s29, %s20
      %p31 = scmp.ge.s32.totalorder %s30, 2
      %s32 = scalar_select %p31, 0, %s30
      %s33 = ssub.s32 %s20, %s32
      %s34 = ssub.s32 %s21, %s28
      %s35 = sor.u32 %s33, %s34
      %p36 = scmp.eq.s32.totalorder %s35, 0
      %s38 = sadd.s32 %s37, 1
      %s39 = scalar_select %p36, %s37, %s38
      %p42 = pneg %p36
      %p43 = scmp.eq.s32.totalorder %s13, 3
      %p44 = por %p42, %p43
      %p45 = scmp.ne.s32.totalorder %s37, %s40
      %p46 = scmp.eq.s32.totalorder %s13, 0
      %p47 = por %p45, %p46
      %p48 = scmp.ne.s32.totalorder %s37, %s40
      %p49 = scmp.eq.s32.totalorder %s18, 3
      %p50 = por %p48, %p49
      %p51 = scmp.ne.s32.totalorder %s40, %s41
      %p52 = scmp.eq.s32.totalorder %s18, 0
      %p53 = por %p51, %p52
      %p54 = scmp.ne.s32.totalorder %s40, %s41
      %p55 = scmp.eq.s32.totalorder %s19, 3
      %p56 = por %p54, %p55
      %p58 = scmp.ne.s32.totalorder %s41, %s57
      %p59 = scmp.eq.s32.totalorder %s19, 0
      %p60 = por %p58, %p59
      %s62 = sadd.s32 %s61, 1
      %p65 = scmp.eq.s32.totalorder %s13, 3
      %p66 = scmp.ne.s32.totalorder %s61, %s63
      %p67 = scmp.eq.s32.totalorder %s13, 0
      %p68 = por %p66, %p67
      %p69 = scmp.ne.s32.totalorder %s61, %s63
      %p70 = scmp.eq.s32.totalorder %s18, 3
      %p71 = por %p69, %p70
      %p72 = scmp.ne.s32.totalorder %s63, %s64
      %p73 = scmp.eq.s32.totalorder %s18, 0
      %p74 = por %p72, %p73
      %p75 = scmp.ne.s32.totalorder %s63, %s64
      %p76 = scmp.eq.s32.totalorder %s19, 3
      %p77 = por %p75, %p76
      %p79 = scmp.ne.s32.totalorder %s64, %s78
      %p80 = scmp.eq.s32.totalorder %s19, 0
      %p81 = por %p79, %p80
      %s83 = sadd.s32 %s82, 1
      %p86 = scmp.eq.s32.totalorder %s13, 3
      %p87 = scmp.ne.s32.totalorder %s82, %s84
      %p88 = scmp.eq.s32.totalorder %s13, 0
      %p89 = por %p87, %p88
      %p90 = scmp.ne.s32.totalorder %s82, %s84
      %p91 = scmp.eq.s32.totalorder %s18, 3
      %p92 = por %p90, %p91
      %p93 = scmp.ne.s32.totalorder %s84, %s85
      %p94 = scmp.eq.s32.totalorder %s18, 0
      %p95 = por %p93, %p94
      %p96 = scmp.ne.s32.totalorder %s84, %s85
      %p97 = scmp.eq.s32.totalorder %s19, 3
      %p98 = por %p96, %p97
      %p100 = scmp.ne.s32.totalorder %s85, %s99
      %p101 = scmp.eq.s32.totalorder %s19, 0
      %p102 = por %p100, %p101
      %p103 = scmp.le.s32.totalorder 1, %s13
      %p104 = scmp.lt.s32.totalorder %s13, 5
      %p105 = pnand %p103, %p104
      %p106 = pneg %p105
      // Predicated region
      $region9: #{tpu_custom_call.1} parent=5 // pred_check
        _
      $region10: #{tpu_custom_call.1} parent=5 // pred_check_branch
        %108 = sbr.rel (%p105) target = $region12
      $region11: #{tpu_custom_call.1} parent=5 // pred_region
        %s109 = ssub.s32 %s13, 1
        // Predicated region
        $region13: #{tpu_custom_call.1} parent=11 // pred_check
          %p110 = pneg %p74
        $region14: #{tpu_custom_call.1} parent=11 // pred_check_branch
          %112 = sbr.rel (%p110) target = $region16
        $region15: #{tpu_custom_call.1} parent=11 // pred_region
          _
        $region16: #{tpu_custom_call.1} parent=11 // pred_fallthru
          _
      $region12: #{tpu_custom_call.1} parent=5 // pred_fallthru
        _
      %p113 = scmp.lt.s32.totalorder %s13, 4
      // Predicated region
      $region17: #{tpu_custom_call.1} parent=5 // pred_check
        %p114 = pneg %p113
      $region18: #{tpu_custom_call.1} parent=5 // pred_check_branch
        %116 = sbr.rel (%p114) target = $region20
      $region19: #{tpu_custom_call.1} parent=5 // pred_region
        // Predicated region
        $region21: #{tpu_custom_call.1} parent=19 // pred_check
          %p117 = pneg %p47
        $region22: #{tpu_custom_call.1} parent=19 // pred_check_branch
          %119 = sbr.rel (%p117) target = $region24
        $region23: #{tpu_custom_call.1} parent=19 // pred_region
          %s120 = sand.u32 %s37, 1
          %s121 = scalar_lea.sflag [#allocation7], %s120
          %s122 = sand.u32 %s37, 1
          %s123 = smul.addr %s122, 64
          %s124 = scalar_lea.vmem [#allocation6], %s123
          %s125 = smul.u32 16, %s20
          %s127 = ssub.s32 1024, 1024
          %128 = vsyncadd %s121, %s127
          %s129 = smul.addr %s125, 2
          %s130 = sadd.s32 %s21, %s129
          %s131 = smul.addr %s130, 64
          %s132 = scalar_lea.hbm %s0, %s131
          %s133 = sshll.u32 %s124, 4
          %s134 = int_to_ptr.vmem [resolvable:$true] %s133
          %139 = dma.hbm_to_vmem [thread:$0]  %s132, 1024, %s134, %s121, 128, 64, 4
        $region24: #{tpu_custom_call.1} parent=19 // pred_fallthru
          _
      $region20: #{tpu_custom_call.1} parent=5 // pred_fallthru
        _
      %p140 = scmp.le.s32.totalorder 1, %s13
      %p141 = scmp.lt.s32.totalorder %s13, 5
      %p142 = pnand %p140, %p141
      %p143 = pneg %p142
      // Predicated region
      $region25: #{tpu_custom_call.1} parent=5 // pred_check
        _
      $region26: #{tpu_custom_call.1} parent=5 // pred_check_branch
        %145 = sbr.rel (%p142) target = $region28
      $region27: #{tpu_custom_call.1} parent=5 // pred_region
        %s146 = ssub.s32 %s13, 1
        %s147 = sand.u32 %s40, 1
        %s148 = scalar_lea.sflag [#allocation7], %s147
        %s149 = sand.u32 %s40, 1
        %s150 = smul.addr %s149, 64
        %s151 = scalar_lea.vmem [#allocation6], %s150
        // Predicated region
        $region29: #{tpu_custom_call.1} parent=27 // pred_check
          %p152 = pneg %p53
        $region30: #{tpu_custom_call.1} parent=27 // pred_check_branch
          %154 = sbr.rel (%p152) target = $region32
        $region31: #{tpu_custom_call.1} parent=27 // pred_region
          %155 = dma.done %s148, 1024
        $region32: #{tpu_custom_call.1} parent=27 // pred_fallthru
          _
        %s156 = sand.u32 %s40, 1
        %s157 = scalar_lea.sflag [#allocation7], %s156
        %s158 = sand.u32 %s40, 1
        %s159 = smul.addr %s158, 64
        %s160 = scalar_lea.vmem [#allocation6], %s159
        %p161 = pneg %p53
        %p162 = pneg %p50
        %p163 = pneg %p74
        %p164 = pneg %p71
        %p165 = pneg %p95
        %p166 = pneg %p92
        %s167 = smul.u32 16, %s22
        %s169 = smul.u32 %s22, 128
        %s170 = smul.u32 %s23, 128
        %p171 = scmp.eq.s32.totalorder %s22, 0
        %p172 = scmp.eq.s32.totalorder %s23, 0
        %p173 = pnand %p171, %p172
        %p174 = pneg %p173
        // Predicated region
        $region33: #{tpu_custom_call.1} parent=27 // pred_check
          _
        $region34: #{tpu_custom_call.1} parent=27 // pred_check_branch
          %176 = sbr.rel (%p173) target = $region36
        $region35: #{tpu_custom_call.1} parent=27 // pred_region
          %p178 = scmp.lt.u32.totalorder 128, 8
          %p179 = pneg %p178
          // Predicated region
          $region37: #{tpu_custom_call.1} parent=35 // pred_check
            _
          $region38: #{tpu_custom_call.1} parent=35 // pred_check_branch
            %181 = sbr.rel (%p178) target = $region40
          $region39: #{tpu_custom_call.1} parent=35 // pred_region
            %s196 = sand.u32 128, 7
            %p197 = scmp.eq.s32.totalorder %s196, 0
            // Predicated region
            $region52: #{tpu_custom_call.1} parent=39 // pred_check
              %p198 = pneg %p197
            $region53: #{tpu_custom_call.1} parent=39 // pred_check_branch
              %200 = sbr.rel (%p198) target = $region55
            $region54: #{tpu_custom_call.1} parent=39 // pred_region
              loop: start=0, step=1, limit=1
              $region56: #{tpu_custom_call.1} parent=54 // loop_pre_header
                _
              $region57: #{tpu_custom_call.1} parent=54 // loop_header
                %s202 = sphi 0, %s206
                %p203 = scmp.ge.s32.totalorder %s202, 1
                %s207 = sphi %s1, %s1
                %s208 = sphi [#allocation2], [#allocation2]
              $region58: #{tpu_custom_call.1} parent=54 // loop_header_branch
                %205 = sbr.rel (%p203) target = $region62
              $region59: #{tpu_custom_call.1} parent=54 // loop_body
                %v209 = vld [vmem:[%s207] sm:$0xff]
                %210 = vst [vmem:[%s208] sm:$0xff] %v209
                %v211 = vld [vmem:[%s207 + $0x8] sm:$0xff]
                %212 = vst [vmem:[%s208 + $0x8] sm:$0xff] %v211
                %v213 = vld [vmem:[%s207 + $0x10] sm:$0xff]
                %214 = vst [vmem:[%s208 + $0x10] sm:$0xff] %v213
                %v215 = vld [vmem:[%s207 + $0x18] sm:$0xff]
                %216 = vst [vmem:[%s208 + $0x18] sm:$0xff] %v215
                %v217 = vld [vmem:[%s207 + $0x20] sm:$0xff]
                %218 = vst [vmem:[%s208 + $0x20] sm:$0xff] %v217
                %v219 = vld [vmem:[%s207 + $0x28] sm:$0xff]
                %220 = vst [vmem:[%s208 + $0x28] sm:$0xff] %v219
                %v221 = vld [vmem:[%s207 + $0x30] sm:$0xff]
                %222 = vst [vmem:[%s208 + $0x30] sm:$0xff] %v221
                %v223 = vld [vmem:[%s207 + $0x38] sm:$0xff]
                %224 = vst [vmem:[%s208 + $0x38] sm:$0xff] %v223
                %v225 = vld [vmem:[%s207 + $0x40] sm:$0xff]
                %226 = vst [vmem:[%s208 + $0x40] sm:$0xff] %v225
                %v227 = vld [vmem:[%s207 + $0x48] sm:$0xff]
                %228 = vst [vmem:[%s208 + $0x48] sm:$0xff] %v227
                %v229 = vld [vmem:[%s207 + $0x50] sm:$0xff]
                %230 = vst [vmem:[%s208 + $0x50] sm:$0xff] %v229
                %v231 = vld [vmem:[%s207 + $0x58] sm:$0xff]
                %232 = vst [vmem:[%s208 + $0x58] sm:$0xff] %v231
                %v233 = vld [vmem:[%s207 + $0x60] sm:$0xff]
                %234 = vst [vmem:[%s208 + $0x60] sm:$0xff] %v233
                %v235 = vld [vmem:[%s207 + $0x68] sm:$0xff]
                %236 = vst [vmem:[%s208 + $0x68] sm:$0xff] %v235
                %v237 = vld [vmem:[%s207 + $0x70] sm:$0xff]
                %238 = vst [vmem:[%s208 + $0x70] sm:$0xff] %v237
                %v239 = vld [vmem:[%s207 + $0x78] sm:$0xff]
                %240 = vst [vmem:[%s208 + $0x78] sm:$0xff] %v239
              $region60: #{tpu_custom_call.1} parent=54 // loop_footer
                %s206 = sadd.s32 1, %s202
              $region61: #{tpu_custom_call.1} parent=54 // loop_footer_branch
                %201 = sbr.rel target = $region57
              $region62: #{tpu_custom_call.1} parent=54 // loop_exit
                _
            $region55: #{tpu_custom_call.1} parent=39 // pred_fallthru
              _
            %p241 = pneg %p197
            // Predicated region
            $region63: #{tpu_custom_call.1} parent=39 // pred_check
              _
            $region64: #{tpu_custom_call.1} parent=39 // pred_check_branch
              %243 = sbr.rel (%p197) target = $region66
            $region65: #{tpu_custom_call.1} parent=39 // pred_region
              %s244 = sand.u32 128, 7
            $region66: #{tpu_custom_call.1} parent=39 // pred_fallthru
              _
          $region40: #{tpu_custom_call.1} parent=35 // pred_fallthru
            _
          // Predicated region
          $region41: #{tpu_custom_call.1} parent=35 // pred_check
            %p182 = pneg %p178
          $region42: #{tpu_custom_call.1} parent=35 // pred_check_branch
            %184 = sbr.rel (%p182) target = $region44
          $region43: #{tpu_custom_call.1} parent=35 // pred_region
            %s185 = sshllo.u32 0, 128
            loop: start=0, step=1, limit=1
            $region45: #{tpu_custom_call.1} parent=43 // loop_pre_header
              _
            $region46: #{tpu_custom_call.1} parent=43 // loop_header
              %s187 = sphi 0, %s191
              %p188 = scmp.ge.s32.totalorder %s187, 1
              %s192 = sphi %s1, %s1
              %s193 = sphi [#allocation2], [#allocation2]
            $region47: #{tpu_custom_call.1} parent=43 // loop_header_branch
              %190 = sbr.rel (%p188) target = $region51
            $region48: #{tpu_custom_call.1} parent=43 // loop_body
              %v194 = vld [vmem:[%s192] sm:%s185]
              %195 = vst [vmem:[%s193] sm:%s185] %v194
            $region49: #{tpu_custom_call.1} parent=43 // loop_footer
              %s191 = sadd.s32 1, %s187
            $region50: #{tpu_custom_call.1} parent=43 // loop_footer_branch
              %186 = sbr.rel target = $region46
            $region51: #{tpu_custom_call.1} parent=43 // loop_exit
              _
          $region44: #{tpu_custom_call.1} parent=35 // pred_fallthru
            _
          // Predicated region
          $region67: #{tpu_custom_call.1} parent=35 // pred_check
            _
          $region68: #{tpu_custom_call.1} parent=35 // pred_check_branch
            %247 = sbr.rel (0) target = $region70
          $region69: #{tpu_custom_call.1} parent=35 // pred_region
            %248 = vsyncadd [#allocation3], 2048
          $region70: #{tpu_custom_call.1} parent=35 // pred_fallthru
            _
          %s249 = smul.u32 4, 32
          %s250 = smul.u32 %s249, 1
          %s251 = sshll.u32 %s250, 4
          %252 = dma.done [#allocation3], %s251
          %253 = vst [vmem:[#allocation9] sm:$0xff] 0.0
          %254 = vst [vmem:[#allocation9 + $0x8] sm:$0xff] 0.0
          %255 = vst [vmem:[#allocation9 + $0x10] sm:$0xff] 0.0
          %256 = vst [vmem:[#allocation9 + $0x18] sm:$0xff] 0.0
          %257 = vst [vmem:[#allocation9 + $0x20] sm:$0xff] 0.0
          %258 = vst [vmem:[#allocation9 + $0x28] sm:$0xff] 0.0
          %259 = vst [vmem:[#allocation9 + $0x30] sm:$0xff] 0.0
          %260 = vst [vmem:[#allocation9 + $0x38] sm:$0xff] 0.0
          %261 = vst [vmem:[#allocation9 + $0x40] sm:$0xff] 0.0
          %262 = vst [vmem:[#allocation9 + $0x48] sm:$0xff] 0.0
          %263 = vst [vmem:[#allocation9 + $0x50] sm:$0xff] 0.0
          %264 = vst [vmem:[#allocation9 + $0x58] sm:$0xff] 0.0
          %265 = vst [vmem:[#allocation9 + $0x60] sm:$0xff] 0.0
          %266 = vst [vmem:[#allocation9 + $0x68] sm:$0xff] 0.0
          %267 = vst [vmem:[#allocation9 + $0x70] sm:$0xff] 0.0
          %268 = vst [vmem:[#allocation9 + $0x78] sm:$0xff] 0.0
          %269 = vst [vmem:[#allocation9 + $0x80] sm:$0xff] 0.0
          %270 = vst [vmem:[#allocation9 + $0x88] sm:$0xff] 0.0
          %271 = vst [vmem:[#allocation9 + $0x90] sm:$0xff] 0.0
          %272 = vst [vmem:[#allocation9 + $0x98] sm:$0xff] 0.0
          %273 = vst [vmem:[#allocation9 + $0xa0] sm:$0xff] 0.0
          %274 = vst [vmem:[#allocation9 + $0xa8] sm:$0xff] 0.0
          %275 = vst [vmem:[#allocation9 + $0xb0] sm:$0xff] 0.0
          %276 = vst [vmem:[#allocation9 + $0xb8] sm:$0xff] 0.0
          %277 = vst [vmem:[#allocation9 + $0xc0] sm:$0xff] 0.0
          %278 = vst [vmem:[#allocation9 + $0xc8] sm:$0xff] 0.0
          %279 = vst [vmem:[#allocation9 + $0xd0] sm:$0xff] 0.0
          %280 = vst [vmem:[#allocation9 + $0xd8] sm:$0xff] 0.0
          %281 = vst [vmem:[#allocation9 + $0xe0] sm:$0xff] 0.0
          %282 = vst [vmem:[#allocation9 + $0xe8] sm:$0xff] 0.0
          %283 = vst [vmem:[#allocation9 + $0xf0] sm:$0xff] 0.0
          %284 = vst [vmem:[#allocation9 + $0xf8] sm:$0xff] 0.0
        $region36: #{tpu_custom_call.1} parent=27 // pred_fallthru
          _
        %v285 = vld [vmem:[%s151] sm:$0xf]
        %v286 = vld [vmem:[%s151 + $0x4] sm:$0xf]
        %v287 = vld [vmem:[%s151 + $0x8] sm:$0xf]
        %v288 = vld [vmem:[%s151 + $0xc] sm:$0xf]
        %v289 = vld [vmem:[%s151 + $0x10] sm:$0xf]
        %v290 = vld [vmem:[%s151 + $0x14] sm:$0xf]
        %v291 = vld [vmem:[%s151 + $0x18] sm:$0xf]
        %v292 = vld [vmem:[%s151 + $0x1c] sm:$0xf]
        %v293 = vld [vmem:[%s151 + $0x20] sm:$0xf]
        %v294 = vld [vmem:[%s151 + $0x24] sm:$0xf]
        %v295 = vld [vmem:[%s151 + $0x28] sm:$0xf]
        %v296 = vld [vmem:[%s151 + $0x2c] sm:$0xf]
        %v297 = vld [vmem:[%s151 + $0x30] sm:$0xf]
        %v298 = vld [vmem:[%s151 + $0x34] sm:$0xf]
        %v299 = vld [vmem:[%s151 + $0x38] sm:$0xf]
        %v300 = vld [vmem:[%s151 + $0x3c] sm:$0xf]
        %s301 = sshra.s32 %s169, 4
        %s302 = sand.u32 %s169, 15
        %s303 = smul.addr %s301, 8
        %s304 = scalar_lea.vmem [#allocation2], %s303
        %v305 = vld [vmem:[%s304] sm:$0xff]
        %v306 = vld [vmem:[%s304 + $0x8] sm:$0xff]
        %v307 = vld [vmem:[%s304 + $0x10] sm:$0xff]
        %v308 = vld [vmem:[%s304 + $0x18] sm:$0xff]
        %v309 = vld [vmem:[%s304 + $0x20] sm:$0xff]
        %v310 = vld [vmem:[%s304 + $0x28] sm:$0xff]
        %v311 = vld [vmem:[%s304 + $0x30] sm:$0xff]
        %v312 = vld [vmem:[%s304 + $0x38] sm:$0xff]
        %s313 = sshra.s32 %s170, 4
        %s314 = sand.u32 %s170, 15
        %s315 = smul.addr %s313, 8
        %s316 = scalar_lea.vmem [#allocation2], %s315
        %v317 = vld [vmem:[%s316] sm:$0xff]
        %v318 = vld [vmem:[%s316 + $0x8] sm:$0xff]
        %v319 = vld [vmem:[%s316 + $0x10] sm:$0xff]
        %v320 = vld [vmem:[%s316 + $0x18] sm:$0xff]
        %v321 = vld [vmem:[%s316 + $0x20] sm:$0xff]
        %v322 = vld [vmem:[%s316 + $0x28] sm:$0xff]
        %v323 = vld [vmem:[%s316 + $0x30] sm:$0xff]
        %v324 = vld [vmem:[%s316 + $0x38] sm:$0xff]
        %v341 = vunpack.c.l.b16 %v285
        %v342 = vunpack.c.l.b16 %v286
        %v343 = vunpack.c.l.b16 %v287
        %v344 = vunpack.c.l.b16 %v288
        %v345 = vunpack.c.l.b16 %v289
        %v346 = vunpack.c.l.b16 %v290
        %v347 = vunpack.c.l.b16 %v291
        %v348 = vunpack.c.l.b16 %v292
        %v349 = vunpack.c.l.b16 %v293
        %v350 = vunpack.c.l.b16 %v294
        %v351 = vunpack.c.l.b16 %v295
        %v352 = vunpack.c.l.b16 %v296
        %v353 = vunpack.c.l.b16 %v297
        %v354 = vunpack.c.l.b16 %v298
        %v355 = vunpack.c.l.b16 %v299
        %v356 = vunpack.c.l.b16 %v300
        %v357 = vpack.c.b16 %v342, %v341
        %v358 = vpack.c.b16 %v344, %v343
        %v359 = vpack.c.b16 %v346, %v345
        %v360 = vpack.c.b16 %v348, %v347
        %v361 = vpack.c.b16 %v350, %v349
        %v362 = vpack.c.b16 %v352, %v351
        %v363 = vpack.c.b16 %v354, %v353
        %v364 = vpack.c.b16 %v356, %v355
        %373 = vmatprep.subr.bf16.mxu0 0
        %374 = vmatpush1.bf16.msra.mxu0 %v317
        %375 = vmatprep.subr.bf16.mxu0 0
        %376 = vmatpush1.bf16.msra.mxu0 %v318
        %377 = vmatprep.subr.bf16.mxu0 0
        %378 = vmatpush1.bf16.msra.mxu0 %v319
        %379 = vmatprep.subr.bf16.mxu0 0
        %380 = vmatpush1.bf16.msra.mxu0 %v320
        %381 = vmatprep.subr.bf16.mxu0 0
        %382 = vmatpush1.bf16.msra.mxu0 %v321
        %383 = vmatprep.subr.bf16.mxu0 0
        %384 = vmatpush1.bf16.msra.mxu0 %v322
        %385 = vmatprep.subr.bf16.mxu0 0
        %386 = vmatpush1.bf16.msra.mxu0 %v323
        %387 = vmatprep.subr.bf16.mxu0 0
        %388 = vmatpush1.bf16.msra.mxu0 %v324
        %389 = vmatprep.subr.bf16.mxu0 0
        %390 = vmatpush1.bf16.msra.mxu0 0
        %391 = vmatprep.subr.bf16.mxu0 0
        %392 = vmatpush1.bf16.msra.mxu0 0
        %393 = vmatprep.subr.bf16.mxu0 0
        %394 = vmatpush1.bf16.msra.mxu0 0
        %395 = vmatprep.subr.bf16.mxu0 0
        %396 = vmatpush1.bf16.msra.mxu0 0
        %397 = vmatprep.subr.bf16.mxu0 0
        %398 = vmatpush1.bf16.msra.mxu0 0
        %399 = vmatprep.subr.bf16.mxu0 0
        %400 = vmatpush1.bf16.msra.mxu0 0
        %401 = vmatprep.subr.bf16.mxu0 0
        %402 = vmatpush1.bf16.msra.mxu0 0
        %403 = vmatprep.subr.bf16.mxu0 0
        %404 = vmatpush1.bf16.msra.mxu0 0
        %405 = vmatprep.mubr.bf16.mxu0 0
        %406 = vmatmul.mubr.bf16.gmra.mrb[0].mxu0 %v357
        %v407 = vpop.f32.mrb[0].mxu0
        %v408 = vadd.f32 0.0, %v407
        %v409 = vpop.f32.mrb[0].mxu0
        %v410 = vpop.f32.mrb[0].mxu0
        %v411 = vadd.f32 0.0, %v410
        %v412 = vpop.f32.mrb[0].mxu0
        %413 = vmatprep.mubr.bf16.mxu0 0
        %414 = vmatmul.mubr.bf16.gmra.mrb[0].mxu0 %v358
        %v415 = vpop.f32.mrb[0].mxu0
        %v416 = vadd.f32 0.0, %v415
        %v417 = vpop.f32.mrb[0].mxu0
        %v418 = vpop.f32.mrb[0].mxu0
        %v419 = vadd.f32 0.0, %v418
        %v420 = vpop.f32.mrb[0].mxu0
        %421 = vmatprep.mubr.bf16.mxu0 0
        %422 = vmatmul.mubr.bf16.gmra.mrb[0].mxu0 %v359
        %v423 = vpop.f32.mrb[0].mxu0
        %v424 = vadd.f32 0.0, %v423
        %v425 = vpop.f32.mrb[0].mxu0
        %v426 = vpop.f32.mrb[0].mxu0
        %v427 = vadd.f32 0.0, %v426
        %v428 = vpop.f32.mrb[0].mxu0
        %429 = vmatprep.mubr.bf16.mxu0 0
        %430 = vmatmul.mubr.bf16.gmra.mrb[0].mxu0 %v360
        %v431 = vpop.f32.mrb[0].mxu0
        %v432 = vadd.f32 0.0, %v431
        %v433 = vpop.f32.mrb[0].mxu0
        %v434 = vpop.f32.mrb[0].mxu0
        %v435 = vadd.f32 0.0, %v434
        %v436 = vpop.f32.mrb[0].mxu0
        %437 = vmatprep.mubr.bf16.mxu0 0
        %438 = vmatmul.mubr.bf16.gmra.mrb[0].mxu0 %v361
        %v439 = vpop.f32.mrb[0].mxu0
        %v440 = vadd.f32 0.0, %v439
        %v441 = vpop.f32.mrb[0].mxu0
        %v442 = vpop.f32.mrb[0].mxu0
        %v443 = vadd.f32 0.0, %v442
        %v444 = vpop.f32.mrb[0].mxu0
        %445 = vmatprep.mubr.bf16.mxu0 0
        %446 = vmatmul.mubr.bf16.gmra.mrb[0].mxu0 %v362
        %v447 = vpop.f32.mrb[0].mxu0
        %v448 = vadd.f32 0.0, %v447
        %v449 = vpop.f32.mrb[0].mxu0
        %v450 = vpop.f32.mrb[0].mxu0
        %v451 = vadd.f32 0.0, %v450
        %v452 = vpop.f32.mrb[0].mxu0
        %453 = vmatprep.mubr.bf16.mxu0 0
        %454 = vmatmul.mubr.bf16.gmra.mrb[0].mxu0 %v363
        %v455 = vpop.f32.mrb[0].mxu0
        %v456 = vadd.f32 0.0, %v455
        %v457 = vpop.f32.mrb[0].mxu0
        %v458 = vpop.f32.mrb[0].mxu0
        %v459 = vadd.f32 0.0, %v458
        %v460 = vpop.f32.mrb[0].mxu0
        %461 = vmatprep.mubr.bf16.mxu0 0
        %462 = vmatmul.mubr.bf16.gmra.mrb[0].mxu0 %v364
        %v463 = vpop.f32.mrb[0].mxu0
        %v464 = vadd.f32 0.0, %v463
        %v465 = vpop.f32.mrb[0].mxu0
        %v466 = vpop.f32.mrb[0].mxu0
        %v467 = vadd.f32 0.0, %v466
        %v468 = vpop.f32.mrb[0].mxu0
        %469 = vdwg.mxu0
        // Predicated region
        $region71: #{tpu_custom_call.1} parent=27 // pred_check
          %p470 = pneg %p172
        $region72: #{tpu_custom_call.1} parent=27 // pred_check_branch
          %472 = sbr.rel (%p470) target = $region74
        $region73: #{tpu_custom_call.1} parent=27 // pred_region
          %vm473 = vcmask 326656
          %474 = vst.msk [vmem:[#allocation4] sm:$0xff] %vm473, %v408
          %475 = vst.msk [vmem:[#allocation4 + $0x8] sm:$0xff] %vm473, %v411
          %476 = vst.msk [vmem:[#allocation4 + $0x10] sm:$0xff] %vm473, %v416
          %477 = vst.msk [vmem:[#allocation4 + $0x18] sm:$0xff] %vm473, %v419
          %478 = vst.msk [vmem:[#allocation4 + $0x20] sm:$0xff] %vm473, %v424
          %479 = vst.msk [vmem:[#allocation4 + $0x28] sm:$0xff] %vm473, %v427
          %480 = vst.msk [vmem:[#allocation4 + $0x30] sm:$0xff] %vm473, %v432
          %481 = vst.msk [vmem:[#allocation4 + $0x38] sm:$0xff] %vm473, %v435
          %482 = vst.msk [vmem:[#allocation4 + $0x40] sm:$0xff] %vm473, %v440
          %483 = vst.msk [vmem:[#allocation4 + $0x48] sm:$0xff] %vm473, %v443
          %484 = vst.msk [vmem:[#allocation4 + $0x50] sm:$0xff] %vm473, %v448
          %485 = vst.msk [vmem:[#allocation4 + $0x58] sm:$0xff] %vm473, %v451
          %486 = vst.msk [vmem:[#allocation4 + $0x60] sm:$0xff] %vm473, %v456
          %487 = vst.msk [vmem:[#allocation4 + $0x68] sm:$0xff] %vm473, %v459
          %488 = vst.msk [vmem:[#allocation4 + $0x70] sm:$0xff] %vm473, %v464
          %489 = vst.msk [vmem:[#allocation4 + $0x78] sm:$0xff] %vm473, %v467
        $region74: #{tpu_custom_call.1} parent=27 // pred_fallthru
          _
        %p490 = scmp.gt.s32.totalorder %s23, 0
        // Predicated region
        $region75: #{tpu_custom_call.1} parent=27 // pred_check
          %p491 = pneg %p490
        $region76: #{tpu_custom_call.1} parent=27 // pred_check_branch
          %493 = sbr.rel (%p491) target = $region78
        $region77: #{tpu_custom_call.1} parent=27 // pred_region
          %v494 = vld [vmem:[#allocation4] sm:$0xff]
          %v495 = vld [vmem:[#allocation4 + $0x8] sm:$0xff]
          %v496 = vld [vmem:[#allocation4 + $0x10] sm:$0xff]
          %v497 = vld [vmem:[#allocation4 + $0x18] sm:$0xff]
          %v498 = vld [vmem:[#allocation4 + $0x20] sm:$0xff]
          %v499 = vld [vmem:[#allocation4 + $0x28] sm:$0xff]
          %v500 = vld [vmem:[#allocation4 + $0x30] sm:$0xff]
          %v501 = vld [vmem:[#allocation4 + $0x38] sm:$0xff]
          %v502 = vld [vmem:[#allocation4 + $0x40] sm:$0xff]
          %v503 = vld [vmem:[#allocation4 + $0x48] sm:$0xff]
          %v504 = vld [vmem:[#allocation4 + $0x50] sm:$0xff]
          %v505 = vld [vmem:[#allocation4 + $0x58] sm:$0xff]
          %v506 = vld [vmem:[#allocation4 + $0x60] sm:$0xff]
          %v507 = vld [vmem:[#allocation4 + $0x68] sm:$0xff]
          %v508 = vld [vmem:[#allocation4 + $0x70] sm:$0xff]
          %v509 = vld [vmem:[#allocation4 + $0x78] sm:$0xff]
          %v510 = vadd.f32 %v494, %v408
          %v511 = vadd.f32 %v495, %v411
          %v512 = vadd.f32 %v496, %v416
          %v513 = vadd.f32 %v497, %v419
          %v514 = vadd.f32 %v498, %v424
          %v515 = vadd.f32 %v499, %v427
          %v516 = vadd.f32 %v500, %v432
          %v517 = vadd.f32 %v501, %v435
          %v518 = vadd.f32 %v502, %v440
          %v519 = vadd.f32 %v503, %v443
          %v520 = vadd.f32 %v504, %v448
          %v521 = vadd.f32 %v505, %v451
          %v522 = vadd.f32 %v506, %v456
          %v523 = vadd.f32 %v507, %v459
          %v524 = vadd.f32 %v508, %v464
          %v525 = vadd.f32 %v509, %v467
          %vm526 = vcmask 326656
          %527 = vst.msk [vmem:[#allocation4] sm:$0xff] %vm526, %v510
          %528 = vst.msk [vmem:[#allocation4 + $0x8] sm:$0xff] %vm526, %v511
          %529 = vst.msk [vmem:[#allocation4 + $0x10] sm:$0xff] %vm526, %v512
          %530 = vst.msk [vmem:[#allocation4 + $0x18] sm:$0xff] %vm526, %v513
          %531 = vst.msk [vmem:[#allocation4 + $0x20] sm:$0xff] %vm526, %v514
          %532 = vst.msk [vmem:[#allocation4 + $0x28] sm:$0xff] %vm526, %v515
          %533 = vst.msk [vmem:[#allocation4 + $0x30] sm:$0xff] %vm526, %v516
          %534 = vst.msk [vmem:[#allocation4 + $0x38] sm:$0xff] %vm526, %v517
          %535 = vst.msk [vmem:[#allocation4 + $0x40] sm:$0xff] %vm526, %v518
          %536 = vst.msk [vmem:[#allocation4 + $0x48] sm:$0xff] %vm526, %v519
          %537 = vst.msk [vmem:[#allocation4 + $0x50] sm:$0xff] %vm526, %v520
          %538 = vst.msk [vmem:[#allocation4 + $0x58] sm:$0xff] %vm526, %v521
          %539 = vst.msk [vmem:[#allocation4 + $0x60] sm:$0xff] %vm526, %v522
          %540 = vst.msk [vmem:[#allocation4 + $0x68] sm:$0xff] %vm526, %v523
          %541 = vst.msk [vmem:[#allocation4 + $0x70] sm:$0xff] %vm526, %v524
          %542 = vst.msk [vmem:[#allocation4 + $0x78] sm:$0xff] %vm526, %v525
        $region78: #{tpu_custom_call.1} parent=27 // pred_fallthru
          _
        %543 = vxpose.xlu0.c.b16.start [1/8] %v357, 128
        %544 = vxpose.xlu0.c.b16.cont [2/8] %v358, 128
        %545 = vxpose.xlu0.c.b16.cont [3/8] %v359, 128
        %546 = vxpose.xlu0.c.b16.cont [4/8] %v360, 128
        %547 = vxpose.xlu0.c.b16.cont [5/8] %v361, 128
        %548 = vxpose.xlu0.c.b16.cont [6/8] %v362, 128
        %549 = vxpose.xlu0.c.b16.cont [7/8] %v363, 128
        %550 = vxpose.xlu0.c.b16.end [8/8] %v364, 128
        %v551 = vpop.trf.xlu0
        %v552 = vpop.trf.xlu0
        %v553 = vpop.trf.xlu0
        %v554 = vpop.trf.xlu0
        %v555 = vpop.trf.xlu0
        %v556 = vpop.trf.xlu0
        %v557 = vpop.trf.xlu0
        %v558 = vpop.trf.xlu0
        %559 = vmatprep.subr.bf16.mxu0 0
        %560 = vmatpush1.bf16.msra.mxu0 %v305
        %561 = vmatprep.subr.bf16.mxu0 0
        %562 = vmatpush1.bf16.msra.mxu0 %v306
        %563 = vmatprep.subr.bf16.mxu0 0
        %564 = vmatpush1.bf16.msra.mxu0 %v307
        %565 = vmatprep.subr.bf16.mxu0 0
        %566 = vmatpush1.bf16.msra.mxu0 %v308
        %567 = vmatprep.subr.bf16.mxu0 0
        %568 = vmatpush1.bf16.msra.mxu0 %v309
        %569 = vmatprep.subr.bf16.mxu0 0
        %570 = vmatpush1.bf16.msra.mxu0 %v310
        %571 = vmatprep.subr.bf16.mxu0 0
        %572 = vmatpush1.bf16.msra.mxu0 %v311
        %573 = vmatprep.subr.bf16.mxu0 0
        %574 = vmatpush1.bf16.msra.mxu0 %v312
        %575 = vmatprep.subr.bf16.mxu0 0
        %576 = vmatpush1.bf16.msra.mxu0 0
        %577 = vmatprep.subr.bf16.mxu0 0
        %578 = vmatpush1.bf16.msra.mxu0 0
        %579 = vmatprep.subr.bf16.mxu0 0
        %580 = vmatpush1.bf16.msra.mxu0 0
        %581 = vmatprep.subr.bf16.mxu0 0
        %582 = vmatpush1.bf16.msra.mxu0 0
        %583 = vmatprep.subr.bf16.mxu0 0
        %584 = vmatpush1.bf16.msra.mxu0 0
        %585 = vmatprep.subr.bf16.mxu0 0
        %586 = vmatpush1.bf16.msra.mxu0 0
        %587 = vmatprep.subr.bf16.mxu0 0
        %588 = vmatpush1.bf16.msra.mxu0 0
        %589 = vmatprep.subr.bf16.mxu0 0
        %590 = vmatpush1.bf16.msra.mxu0 0
        %591 = vmatprep.mubr.bf16.mxu0 0
        %592 = vmatmul.mubr.bf16.gmra.mrb[0].mxu0 %v551
        %v593 = vpop.f32.mrb[0].mxu0
        %v594 = vadd.f32 0.0, %v593
        %v595 = vpop.f32.mrb[0].mxu0
        %v596 = vpop.f32.mrb[0].mxu0
        %v597 = vadd.f32 0.0, %v596
        %v598 = vpop.f32.mrb[0].mxu0
        %599 = vmatprep.mubr.bf16.mxu0 0
        %600 = vmatmul.mubr.bf16.gmra.mrb[0].mxu0 %v552
        %v601 = vpop.f32.mrb[0].mxu0
        %v602 = vadd.f32 0.0, %v601
        %v603 = vpop.f32.mrb[0].mxu0
        %v604 = vpop.f32.mrb[0].mxu0
        %v605 = vadd.f32 0.0, %v604
        %v606 = vpop.f32.mrb[0].mxu0
        %607 = vmatprep.mubr.bf16.mxu0 0
        %608 = vmatmul.mubr.bf16.gmra.mrb[0].mxu0 %v553
        %v609 = vpop.f32.mrb[0].mxu0
        %v610 = vadd.f32 0.0, %v609
        %v611 = vpop.f32.mrb[0].mxu0
        %v612 = vpop.f32.mrb[0].mxu0
        %v613 = vadd.f32 0.0, %v612
        %v614 = vpop.f32.mrb[0].mxu0
        %615 = vmatprep.mubr.bf16.mxu0 0
        %616 = vmatmul.mubr.bf16.gmra.mrb[0].mxu0 %v554
        %v617 = vpop.f32.mrb[0].mxu0
        %v618 = vadd.f32 0.0, %v617
        %v619 = vpop.f32.mrb[0].mxu0
        %v620 = vpop.f32.mrb[0].mxu0
        %v621 = vadd.f32 0.0, %v620
        %v622 = vpop.f32.mrb[0].mxu0
        %623 = vmatprep.mubr.bf16.mxu0 0
        %624 = vmatmul.mubr.bf16.gmra.mrb[0].mxu0 %v555
        %v625 = vpop.f32.mrb[0].mxu0
        %v626 = vadd.f32 0.0, %v625
        %v627 = vpop.f32.mrb[0].mxu0
        %v628 = vpop.f32.mrb[0].mxu0
        %v629 = vadd.f32 0.0, %v628
        %v630 = vpop.f32.mrb[0].mxu0
        %631 = vmatprep.mubr.bf16.mxu0 0
        %632 = vmatmul.mubr.bf16.gmra.mrb[0].mxu0 %v556
        %v633 = vpop.f32.mrb[0].mxu0
        %v634 = vadd.f32 0.0, %v633
        %v635 = vpop.f32.mrb[0].mxu0
        %v636 = vpop.f32.mrb[0].mxu0
        %v637 = vadd.f32 0.0, %v636
        %v638 = vpop.f32.mrb[0].mxu0
        %639 = vmatprep.mubr.bf16.mxu0 0
        %640 = vmatmul.mubr.bf16.gmra.mrb[0].mxu0 %v557
        %v641 = vpop.f32.mrb[0].mxu0
        %v642 = vadd.f32 0.0, %v641
        %v643 = vpop.f32.mrb[0].mxu0
        %v644 = vpop.f32.mrb[0].mxu0
        %v645 = vadd.f32 0.0, %v644
        %v646 = vpop.f32.mrb[0].mxu0
        %647 = vmatprep.mubr.bf16.mxu0 0
        %648 = vmatmul.mubr.bf16.gmra.mrb[0].mxu0 %v558
        %v649 = vpop.f32.mrb[0].mxu0
        %v650 = vadd.f32 0.0, %v649
        %v651 = vpop.f32.mrb[0].mxu0
        %v652 = vpop.f32.mrb[0].mxu0
        %v653 = vadd.f32 0.0, %v652
        %v654 = vpop.f32.mrb[0].mxu0
        %655 = vdwg.mxu0
        // Predicated region
        $region79: #{tpu_custom_call.1} parent=27 // pred_check
          %p656 = pneg %p171
        $region80: #{tpu_custom_call.1} parent=27 // pred_check_branch
          %658 = sbr.rel (%p656) target = $region82
        $region81: #{tpu_custom_call.1} parent=27 // pred_region
          %s659 = scalar_lea.vmem [#allocation5], %s170
          %vm660 = vcmask 326656
          %661 = vst.msk [vmem:[%s659] sm:$0xff] %vm660, %v594
          %662 = vst.msk [vmem:[%s659 + $0x8] sm:$0xff] %vm660, %v597
          %663 = vst.msk [vmem:[%s659 + $0x10] sm:$0xff] %vm660, %v602
          %664 = vst.msk [vmem:[%s659 + $0x18] sm:$0xff] %vm660, %v605
          %665 = vst.msk [vmem:[%s659 + $0x20] sm:$0xff] %vm660, %v610
          %666 = vst.msk [vmem:[%s659 + $0x28] sm:$0xff] %vm660, %v613
          %667 = vst.msk [vmem:[%s659 + $0x30] sm:$0xff] %vm660, %v618
          %668 = vst.msk [vmem:[%s659 + $0x38] sm:$0xff] %vm660, %v621
          %669 = vst.msk [vmem:[%s659 + $0x40] sm:$0xff] %vm660, %v626
          %670 = vst.msk [vmem:[%s659 + $0x48] sm:$0xff] %vm660, %v629
          %671 = vst.msk [vmem:[%s659 + $0x50] sm:$0xff] %vm660, %v634
          %672 = vst.msk [vmem:[%s659 + $0x58] sm:$0xff] %vm660, %v637
          %673 = vst.msk [vmem:[%s659 + $0x60] sm:$0xff] %vm660, %v642
          %674 = vst.msk [vmem:[%s659 + $0x68] sm:$0xff] %vm660, %v645
          %675 = vst.msk [vmem:[%s659 + $0x70] sm:$0xff] %vm660, %v650
          %676 = vst.msk [vmem:[%s659 + $0x78] sm:$0xff] %vm660, %v653
        $region82: #{tpu_custom_call.1} parent=27 // pred_fallthru
          _
        %p677 = scmp.gt.s32.totalorder %s22, 0
        // Predicated region
        $region83: #{tpu_custom_call.1} parent=27 // pred_check
          %p678 = pneg %p677
        $region84: #{tpu_custom_call.1} parent=27 // pred_check_branch
          %680 = sbr.rel (%p678) target = $region86
        $region85: #{tpu_custom_call.1} parent=27 // pred_region
          %s681 = scalar_lea.vmem [#allocation5], %s170
          %v682 = vld [vmem:[%s681] sm:$0xff]
          %v683 = vld [vmem:[%s681 + $0x8] sm:$0xff]
          %v684 = vld [vmem:[%s681 + $0x10] sm:$0xff]
          %v685 = vld [vmem:[%s681 + $0x18] sm:$0xff]
          %v686 = vld [vmem:[%s681 + $0x20] sm:$0xff]
          %v687 = vld [vmem:[%s681 + $0x28] sm:$0xff]
          %v688 = vld [vmem:[%s681 + $0x30] sm:$0xff]
          %v689 = vld [vmem:[%s681 + $0x38] sm:$0xff]
          %v690 = vld [vmem:[%s681 + $0x40] sm:$0xff]
          %v691 = vld [vmem:[%s681 + $0x48] sm:$0xff]
          %v692 = vld [vmem:[%s681 + $0x50] sm:$0xff]
          %v693 = vld [vmem:[%s681 + $0x58] sm:$0xff]
          %v694 = vld [vmem:[%s681 + $0x60] sm:$0xff]
          %v695 = vld [vmem:[%s681 + $0x68] sm:$0xff]
          %v696 = vld [vmem:[%s681 + $0x70] sm:$0xff]
          %v697 = vld [vmem:[%s681 + $0x78] sm:$0xff]
          %v698 = vadd.f32 %v682, %v594
          %v699 = vadd.f32 %v683, %v597
          %v700 = vadd.f32 %v684, %v602
          %v701 = vadd.f32 %v685, %v605
          %v702 = vadd.f32 %v686, %v610
          %v703 = vadd.f32 %v687, %v613
          %v704 = vadd.f32 %v688, %v618
          %v705 = vadd.f32 %v689, %v621
          %v706 = vadd.f32 %v690, %v626
          %v707 = vadd.f32 %v691, %v629
          %v708 = vadd.f32 %v692, %v634
          %v709 = vadd.f32 %v693, %v637
          %v710 = vadd.f32 %v694, %v642
          %v711 = vadd.f32 %v695, %v645
          %v712 = vadd.f32 %v696, %v650
          %v713 = vadd.f32 %v697, %v653
          %vm714 = vcmask 326656
          %715 = vst.msk [vmem:[%s681] sm:$0xff] %vm714, %v698
          %716 = vst.msk [vmem:[%s681 + $0x8] sm:$0xff] %vm714, %v699
          %717 = vst.msk [vmem:[%s681 + $0x10] sm:$0xff] %vm714, %v700
          %718 = vst.msk [vmem:[%s681 + $0x18] sm:$0xff] %vm714, %v701
          %719 = vst.msk [vmem:[%s681 + $0x20] sm:$0xff] %vm714, %v702
          %720 = vst.msk [vmem:[%s681 + $0x28] sm:$0xff] %vm714, %v703
          %721 = vst.msk [vmem:[%s681 + $0x30] sm:$0xff] %vm714, %v704
          %722 = vst.msk [vmem:[%s681 + $0x38] sm:$0xff] %vm714, %v705
          %723 = vst.msk [vmem:[%s681 + $0x40] sm:$0xff] %vm714, %v706
          %724 = vst.msk [vmem:[%s681 + $0x48] sm:$0xff] %vm714, %v707
          %725 = vst.msk [vmem:[%s681 + $0x50] sm:$0xff] %vm714, %v708
          %726 = vst.msk [vmem:[%s681 + $0x58] sm:$0xff] %vm714, %v709
          %727 = vst.msk [vmem:[%s681 + $0x60] sm:$0xff] %vm714, %v710
          %728 = vst.msk [vmem:[%s681 + $0x68] sm:$0xff] %vm714, %v711
          %729 = vst.msk [vmem:[%s681 + $0x70] sm:$0xff] %vm714, %v712
          %730 = vst.msk [vmem:[%s681 + $0x78] sm:$0xff] %vm714, %v713
        $region86: #{tpu_custom_call.1} parent=27 // pred_fallthru
          _
        %p731 = scmp.eq.s32.totalorder %s23, 1
        // Predicated region
        $region87: #{tpu_custom_call.1} parent=27 // pred_check
          %p732 = pneg %p731
        $region88: #{tpu_custom_call.1} parent=27 // pred_check_branch
          %734 = sbr.rel (%p732) target = $region90
        $region89: #{tpu_custom_call.1} parent=27 // pred_region
          %v735 = vld [vmem:[#allocation4] sm:$0xff]
          %v736 = vld [vmem:[#allocation4 + $0x8] sm:$0xff]
          %v737 = vld [vmem:[#allocation4 + $0x10] sm:$0xff]
          %v738 = vld [vmem:[#allocation4 + $0x18] sm:$0xff]
          %v739 = vld [vmem:[#allocation4 + $0x20] sm:$0xff]
          %v740 = vld [vmem:[#allocation4 + $0x28] sm:$0xff]
          %v741 = vld [vmem:[#allocation4 + $0x30] sm:$0xff]
          %v742 = vld [vmem:[#allocation4 + $0x38] sm:$0xff]
          %v743 = vld [vmem:[#allocation4 + $0x40] sm:$0xff]
          %v744 = vld [vmem:[#allocation4 + $0x48] sm:$0xff]
          %v745 = vld [vmem:[#allocation4 + $0x50] sm:$0xff]
          %v746 = vld [vmem:[#allocation4 + $0x58] sm:$0xff]
          %v747 = vld [vmem:[#allocation4 + $0x60] sm:$0xff]
          %v748 = vld [vmem:[#allocation4 + $0x68] sm:$0xff]
          %v749 = vld [vmem:[#allocation4 + $0x70] sm:$0xff]
          %v750 = vld [vmem:[#allocation4 + $0x78] sm:$0xff]
          %vm751 = vcmp.gt.f32.partialorder %v735, 0.0
          %vm752 = vcmp.gt.f32.partialorder %v736, 0.0
          %vm753 = vcmp.gt.f32.partialorder %v737, 0.0
          %vm754 = vcmp.gt.f32.partialorder %v738, 0.0
          %vm755 = vcmp.gt.f32.partialorder %v739, 0.0
          %vm756 = vcmp.gt.f32.partialorder %v740, 0.0
          %vm757 = vcmp.gt.f32.partialorder %v741, 0.0
          %vm758 = vcmp.gt.f32.partialorder %v742, 0.0
          %vm759 = vcmp.gt.f32.partialorder %v743, 0.0
          %vm760 = vcmp.gt.f32.partialorder %v744, 0.0
          %vm761 = vcmp.gt.f32.partialorder %v745, 0.0
          %vm762 = vcmp.gt.f32.partialorder %v746, 0.0
          %vm763 = vcmp.gt.f32.partialorder %v747, 0.0
          %vm764 = vcmp.gt.f32.partialorder %v748, 0.0
          %vm765 = vcmp.gt.f32.partialorder %v749, 0.0
          %vm766 = vcmp.gt.f32.partialorder %v750, 0.0
          %v767 = vmax.f32 %v735, 1.0
          %v768 = vmax.f32 %v736, 1.0
          %v769 = vmax.f32 %v737, 1.0
          %v770 = vmax.f32 %v738, 1.0
          %v771 = vmax.f32 %v739, 1.0
          %v772 = vmax.f32 %v740, 1.0
          %v773 = vmax.f32 %v741, 1.0
          %v774 = vmax.f32 %v742, 1.0
          %v775 = vmax.f32 %v743, 1.0
          %v776 = vmax.f32 %v744, 1.0
          %v777 = vmax.f32 %v745, 1.0
          %v778 = vmax.f32 %v746, 1.0
          %v779 = vmax.f32 %v747, 1.0
          %v780 = vmax.f32 %v748, 1.0
          %v781 = vmax.f32 %v749, 1.0
          %v782 = vmax.f32 %v750, 1.0
          %v783 = vrcp.pop %v767
          %v784 = vmul.f32 1.0, %v783
          %v785 = vrcp.pop %v768
          %v786 = vmul.f32 1.0, %v785
          %v787 = vrcp.pop %v769
          %v788 = vmul.f32 1.0, %v787
          %v789 = vrcp.pop %v770
          %v790 = vmul.f32 1.0, %v789
          %v791 = vrcp.pop %v771
          %v792 = vmul.f32 1.0, %v791
          %v793 = vrcp.pop %v772
          %v794 = vmul.f32 1.0, %v793
          %v795 = vrcp.pop %v773
          %v796 = vmul.f32 1.0, %v795
          %v797 = vrcp.pop %v774
          %v798 = vmul.f32 1.0, %v797
          %v799 = vrcp.pop %v775
          %v800 = vmul.f32 1.0, %v799
          %v801 = vrcp.pop %v776
          %v802 = vmul.f32 1.0, %v801
          %v803 = vrcp.pop %v777
          %v804 = vmul.f32 1.0, %v803
          %v805 = vrcp.pop %v778
          %v806 = vmul.f32 1.0, %v805
          %v807 = vrcp.pop %v779
          %v808 = vmul.f32 1.0, %v807
          %v809 = vrcp.pop %v780
          %v810 = vmul.f32 1.0, %v809
          %v811 = vrcp.pop %v781
          %v812 = vmul.f32 1.0, %v811
          %v813 = vrcp.pop %v782
          %v814 = vmul.f32 1.0, %v813
          %v815 = vsel %vm751, %v784, 0.0
          %v816 = vsel %vm752, %v786, 0.0
          %v817 = vsel %vm753, %v788, 0.0
          %v818 = vsel %vm754, %v790, 0.0
          %v819 = vsel %vm755, %v792, 0.0
          %v820 = vsel %vm756, %v794, 0.0
          %v821 = vsel %vm757, %v796, 0.0
          %v822 = vsel %vm758, %v798, 0.0
          %v823 = vsel %vm759, %v800, 0.0
          %v824 = vsel %vm760, %v802, 0.0
          %v825 = vsel %vm761, %v804, 0.0
          %v826 = vsel %vm762, %v806, 0.0
          %v827 = vsel %vm763, %v808, 0.0
          %v828 = vsel %vm764, %v810, 0.0
          %v829 = vsel %vm765, %v812, 0.0
          %v830 = vsel %vm766, %v814, 0.0
          %832 = vset.pattern.permute.xlu0 0
          %833 = vperm.xlu0 %832, %v815
          %v834 = vpop.permute.xlu0 %833
          %837 = vset.pattern.permute.xlu0 0
          %838 = vperm.xlu0 %837, %v816
          %v839 = vpop.permute.xlu0 %838
          %842 = vset.pattern.permute.xlu0 0
          %843 = vperm.xlu0 %842, %v817
          %v844 = vpop.permute.xlu0 %843
          %847 = vset.pattern.permute.xlu0 0
          %848 = vperm.xlu0 %847, %v818
          %v849 = vpop.permute.xlu0 %848
          %852 = vset.pattern.permute.xlu0 0
          %853 = vperm.xlu0 %852, %v819
          %v854 = vpop.permute.xlu0 %853
          %857 = vset.pattern.permute.xlu0 0
          %858 = vperm.xlu0 %857, %v820
          %v859 = vpop.permute.xlu0 %858
          %862 = vset.pattern.permute.xlu0 0
          %863 = vperm.xlu0 %862, %v821
          %v864 = vpop.permute.xlu0 %863
          %867 = vset.pattern.permute.xlu0 0
          %868 = vperm.xlu0 %867, %v822
          %v869 = vpop.permute.xlu0 %868
          %872 = vset.pattern.permute.xlu0 0
          %873 = vperm.xlu0 %872, %v823
          %v874 = vpop.permute.xlu0 %873
          %877 = vset.pattern.permute.xlu0 0
          %878 = vperm.xlu0 %877, %v824
          %v879 = vpop.permute.xlu0 %878
          %882 = vset.pattern.permute.xlu0 0
          %883 = vperm.xlu0 %882, %v825
          %v884 = vpop.permute.xlu0 %883
          %887 = vset.pattern.permute.xlu0 0
          %888 = vperm.xlu0 %887, %v826
          %v889 = vpop.permute.xlu0 %888
          %892 = vset.pattern.permute.xlu0 0
          %893 = vperm.xlu0 %892, %v827
          %v894 = vpop.permute.xlu0 %893
          %897 = vset.pattern.permute.xlu0 0
          %898 = vperm.xlu0 %897, %v828
          %v899 = vpop.permute.xlu0 %898
          %902 = vset.pattern.permute.xlu0 0
          %903 = vperm.xlu0 %902, %v829
          %v904 = vpop.permute.xlu0 %903
          %907 = vset.pattern.permute.xlu0 0
          %908 = vperm.xlu0 %907, %v830
          %v909 = vpop.permute.xlu0 %908
          %v911 = vmul.f32 %v735, %v834
          %v912 = vmul.f32 %v736, %v839
          %v913 = vmul.f32 %v737, %v844
          %v914 = vmul.f32 %v738, %v849
          %v915 = vmul.f32 %v739, %v854
          %v916 = vmul.f32 %v740, %v859
          %v917 = vmul.f32 %v741, %v864
          %v918 = vmul.f32 %v742, %v869
          %v919 = vmul.f32 %v743, %v874
          %v920 = vmul.f32 %v744, %v879
          %v921 = vmul.f32 %v745, %v884
          %v922 = vmul.f32 %v746, %v889
          %v923 = vmul.f32 %v747, %v894
          %v924 = vmul.f32 %v748, %v899
          %v925 = vmul.f32 %v749, %v904
          %v926 = vmul.f32 %v750, %v909
          %v927 = vld [vmem:[%s2] sm:$0xff]
          %v928 = vld [vmem:[%s2 + $0x8] sm:$0xff]
          %v929 = vld [vmem:[%s2 + $0x10] sm:$0xff]
          %v930 = vld [vmem:[%s2 + $0x18] sm:$0xff]
          %v931 = vld [vmem:[%s2 + $0x20] sm:$0xff]
          %v932 = vld [vmem:[%s2 + $0x28] sm:$0xff]
          %v933 = vld [vmem:[%s2 + $0x30] sm:$0xff]
          %v934 = vld [vmem:[%s2 + $0x38] sm:$0xff]
          %v935 = vld [vmem:[%s2 + $0x40] sm:$0xff]
          %v936 = vld [vmem:[%s2 + $0x48] sm:$0xff]
          %v937 = vunpack.c.l.bf16 %v305
          %v938 = vunpack.c.h.bf16 %v305
          %v939 = vunpack.c.l.bf16 %v306
          %v940 = vunpack.c.h.bf16 %v306
          %v941 = vunpack.c.l.bf16 %v307
          %v942 = vunpack.c.h.bf16 %v307
          %v943 = vunpack.c.l.bf16 %v308
          %v944 = vunpack.c.h.bf16 %v308
          %v945 = vunpack.c.l.bf16 %v309
          %v946 = vunpack.c.h.bf16 %v309
          %v947 = vunpack.c.l.bf16 %v310
          %v948 = vunpack.c.h.bf16 %v310
          %v949 = vunpack.c.l.bf16 %v311
          %v950 = vunpack.c.h.bf16 %v311
          %v951 = vunpack.c.l.bf16 %v312
          %v952 = vunpack.c.h.bf16 %v312
          %vm953 = vcmask 326656
          %v955 = vsel %vm953, %v911, 0
          %v958 = vsel %vm953, %v912, 0
          %v961 = vsel %vm953, %v913, 0
          %v964 = vsel %vm953, %v914, 0
          %v967 = vsel %vm953, %v915, 0
          %v970 = vsel %vm953, %v916, 0
          %v973 = vsel %vm953, %v917, 0
          %v976 = vsel %vm953, %v918, 0
          %v979 = vsel %vm953, %v919, 0
          %v982 = vsel %vm953, %v920, 0
          %v985 = vsel %vm953, %v921, 0
          %v988 = vsel %vm953, %v922, 0
          %v991 = vsel %vm953, %v923, 0
          %v994 = vsel %vm953, %v924, 0
          %v997 = vsel %vm953, %v925, 0
          %v1000 = vsel %vm953, %v926, 0
          %1002 = vmatprep.subr.mxu0 0.0
          %1003 = vmatpush1.msra.mxu0 %v932
          %1004 = vmatprep.subr.mxu0 0.0
          %1005 = vmatpush1.msra.mxu0 %v933
          %1006 = vmatprep.subr.mxu0 0.0
          %1007 = vmatpush1.msra.mxu0 %v934
          %1008 = vmatprep.subr.mxu0 0.0
          %1009 = vmatpush1.msra.mxu0 %v935
          %1010 = vmatprep.subr.mxu0 0.0
          %1011 = vmatpush1.msra.mxu0 %v936
          %1012 = vmatprep.subr.mxu0 0.0
          %1013 = vmatpush1.msra.mxu0 0.0
          %1014 = vmatprep.subr.mxu0 0.0
          %1015 = vmatpush1.msra.mxu0 0.0
          %1016 = vmatprep.subr.mxu0 0.0
          %1017 = vmatpush1.msra.mxu0 0.0
          %1018 = vmatprep.subr.mxu0 0.0
          %1019 = vmatpush1.msra.mxu0 0.0
          %1020 = vmatprep.subr.mxu0 0.0
          %1021 = vmatpush1.msra.mxu0 0.0
          %1022 = vmatprep.subr.mxu0 0.0
          %1023 = vmatpush1.msra.mxu0 0.0
          %1024 = vmatprep.subr.mxu0 0.0
          %1025 = vmatpush1.msra.mxu0 0.0
          %1026 = vmatprep.subr.mxu0 0.0
          %1027 = vmatpush1.msra.mxu0 0.0
          %1028 = vmatprep.subr.mxu0 0.0
          %1029 = vmatpush1.msra.mxu0 0.0
          %1030 = vmatprep.subr.mxu0 0.0
          %1031 = vmatpush1.msra.mxu0 0.0
          %1032 = vmatprep.subr.mxu0 0.0
          %1033 = vmatpush1.msra.mxu0 0.0
          %1034 = vmatprep.subr.mxu0 0.0
          %1035 = vmatpush1.msra.mxu0 0.0
          %1036 = vmatprep.subr.mxu0 0.0
          %1037 = vmatpush1.msra.mxu0 0.0
          %1038 = vmatprep.subr.mxu0 0.0
          %1039 = vmatpush1.msra.mxu0 0.0
          %1040 = vmatprep.subr.mxu0 0.0
          %1041 = vmatpush1.msra.mxu0 0.0
          %1042 = vmatprep.subr.mxu0 0.0
          %1043 = vmatpush1.msra.mxu0 0.0
          %1044 = vmatprep.subr.mxu0 0.0
          %1045 = vmatpush1.msra.mxu0 0.0
          %1046 = vmatprep.subr.mxu0 0.0
          %1047 = vmatpush1.msra.mxu0 0.0
          %1048 = vmatprep.subr.mxu0 0.0
          %1049 = vmatpush1.msra.mxu0 0.0
          %1050 = vmatprep.subr.mxu0 0.0
          %1051 = vmatpush1.msra.mxu0 0.0
          %1052 = vmatprep.subr.mxu0 0.0
          %1053 = vmatpush1.msra.mxu0 0.0
          %1054 = vmatprep.subr.mxu0 0.0
          %1055 = vmatpush1.msra.mxu0 0.0
          %1056 = vmatprep.subr.mxu0 0.0
          %1057 = vmatpush1.msra.mxu0 0.0
          %1058 = vmatprep.subr.mxu0 0.0
          %1059 = vmatpush1.msra.mxu0 0.0
          %1060 = vmatprep.subr.mxu0 0.0
          %1061 = vmatpush1.msra.mxu0 0.0
          %1062 = vmatprep.subr.mxu0 0.0
          %1063 = vmatpush1.msra.mxu0 0.0
          %1064 = vmatprep.subr.mxu0 0.0
          %1065 = vmatpush1.msra.mxu0 0.0
          %1066 = vmatprep.mubr.f32.mxu0 0.0
          %1067 = vmatmul.mubr.f32.gmra.mrb[0].mxu0 %v955
          %v1068 = vpop.f32.mrb[0].mxu0
          %v1069 = vadd.f32 0.0, %v1068
          %v1070 = vpop.f32.mrb[0].mxu0
          %1071 = vmatprep.mubr.f32.mxu0 0.0
          %1072 = vmatmul.mubr.f32.gmra.mrb[0].mxu0 %v958
          %v1073 = vpop.f32.mrb[0].mxu0
          %v1074 = vadd.f32 0.0, %v1073
          %v1075 = vpop.f32.mrb[0].mxu0
          %1076 = vmatprep.mubr.f32.mxu0 0.0
          %1077 = vmatmul.mubr.f32.gmra.mrb[0].mxu0 %v961
          %v1078 = vpop.f32.mrb[0].mxu0
          %v1079 = vadd.f32 0.0, %v1078
          %v1080 = vpop.f32.mrb[0].mxu0
          %1081 = vmatprep.mubr.f32.mxu0 0.0
          %1082 = vmatmul.mubr.f32.gmra.mrb[0].mxu0 %v964
          %v1083 = vpop.f32.mrb[0].mxu0
          %v1084 = vadd.f32 0.0, %v1083
          %v1085 = vpop.f32.mrb[0].mxu0
          %1086 = vmatprep.mubr.f32.mxu0 0.0
          %1087 = vmatmul.mubr.f32.gmra.mrb[0].mxu0 %v967
          %v1088 = vpop.f32.mrb[0].mxu0
          %v1089 = vadd.f32 0.0, %v1088
          %v1090 = vpop.f32.mrb[0].mxu0
          %1091 = vmatprep.mubr.f32.mxu0 0.0
          %1092 = vmatmul.mubr.f32.gmra.mrb[0].mxu0 %v970
          %v1093 = vpop.f32.mrb[0].mxu0
          %v1094 = vadd.f32 0.0, %v1093
          %v1095 = vpop.f32.mrb[0].mxu0
          %1096 = vmatprep.mubr.f32.mxu0 0.0
          %1097 = vmatmul.mubr.f32.gmra.mrb[0].mxu0 %v973
          %v1098 = vpop.f32.mrb[0].mxu0
          %v1099 = vadd.f32 0.0, %v1098
          %v1100 = vpop.f32.mrb[0].mxu0
          %1101 = vmatprep.mubr.f32.mxu0 0.0
          %1102 = vmatmul.mubr.f32.gmra.mrb[0].mxu0 %v976
          %v1103 = vpop.f32.mrb[0].mxu0
          %v1104 = vadd.f32 0.0, %v1103
          %v1105 = vpop.f32.mrb[0].mxu0
          %1106 = vmatprep.mubr.f32.mxu0 0.0
          %1107 = vmatmul.mubr.f32.gmra.mrb[0].mxu0 %v979
          %v1108 = vpop.f32.mrb[0].mxu0
          %v1109 = vadd.f32 0.0, %v1108
          %v1110 = vpop.f32.mrb[0].mxu0
          %1111 = vmatprep.mubr.f32.mxu0 0.0
          %1112 = vmatmul.mubr.f32.gmra.mrb[0].mxu0 %v982
          %v1113 = vpop.f32.mrb[0].mxu0
          %v1114 = vadd.f32 0.0, %v1113
          %v1115 = vpop.f32.mrb[0].mxu0
          %1116 = vmatprep.mubr.f32.mxu0 0.0
          %1117 = vmatmul.mubr.f32.gmra.mrb[0].mxu0 %v985
          %v1118 = vpop.f32.mrb[0].mxu0
          %v1119 = vadd.f32 0.0, %v1118
          %v1120 = vpop.f32.mrb[0].mxu0
          %1121 = vmatprep.mubr.f32.mxu0 0.0
          %1122 = vmatmul.mubr.f32.gmra.mrb[0].mxu0 %v988
          %v1123 = vpop.f32.mrb[0].mxu0
          %v1124 = vadd.f32 0.0, %v1123
          %v1125 = vpop.f32.mrb[0].mxu0
          %1126 = vmatprep.mubr.f32.mxu0 0.0
          %1127 = vmatmul.mubr.f32.gmra.mrb[0].mxu0 %v991
          %v1128 = vpop.f32.mrb[0].mxu0
          %v1129 = vadd.f32 0.0, %v1128
          %v1130 = vpop.f32.mrb[0].mxu0
          %1131 = vmatprep.mubr.f32.mxu0 0.0
          %1132 = vmatmul.mubr.f32.gmra.mrb[0].mxu0 %v994
          %v1133 = vpop.f32.mrb[0].mxu0
          %v1134 = vadd.f32 0.0, %v1133
          %v1135 = vpop.f32.mrb[0].mxu0
          %1136 = vmatprep.mubr.f32.mxu0 0.0
          %1137 = vmatmul.mubr.f32.gmra.mrb[0].mxu0 %v997
          %v1138 = vpop.f32.mrb[0].mxu0
          %v1139 = vadd.f32 0.0, %v1138
          %v1140 = vpop.f32.mrb[0].mxu0
          %1141 = vmatprep.mubr.f32.mxu0 0.0
          %1142 = vmatmul.mubr.f32.gmra.mrb[0].mxu0 %v1000
          %v1143 = vpop.f32.mrb[0].mxu0
          %v1144 = vadd.f32 0.0, %v1143
          %v1145 = vpop.f32.mrb[0].mxu0
          %1146 = vdwg.mxu0
          %v1148 = vsel %vm953, %v937, 0
          %v1151 = vsel %vm953, %v938, 0
          %v1154 = vsel %vm953, %v939, 0
          %v1157 = vsel %vm953, %v940, 0
          %v1160 = vsel %vm953, %v941, 0
          %v1163 = vsel %vm953, %v942, 0
          %v1166 = vsel %vm953, %v943, 0
          %v1169 = vsel %vm953, %v944, 0
          %v1172 = vsel %vm953, %v945, 0
          %v1175 = vsel %vm953, %v946, 0
          %v1178 = vsel %vm953, %v947, 0
          %v1181 = vsel %vm953, %v948, 0
          %v1184 = vsel %vm953, %v949, 0
          %v1187 = vsel %vm953, %v950, 0
          %v1190 = vsel %vm953, %v951, 0
          %v1193 = vsel %vm953, %v952, 0
          %1195 = vmatprep.subr.mxu0 0.0
          %1196 = vmatpush1.msra.mxu0 %v927
          %1197 = vmatprep.subr.mxu0 0.0
          %1198 = vmatpush1.msra.mxu0 %v928
          %1199 = vmatprep.subr.mxu0 0.0
          %1200 = vmatpush1.msra.mxu0 %v929
          %1201 = vmatprep.subr.mxu0 0.0
          %1202 = vmatpush1.msra.mxu0 %v930
          %1203 = vmatprep.subr.mxu0 0.0
          %1204 = vmatpush1.msra.mxu0 %v931
          %1205 = vmatprep.subr.mxu0 0.0
          %1206 = vmatpush1.msra.mxu0 0.0
          %1207 = vmatprep.subr.mxu0 0.0
          %1208 = vmatpush1.msra.mxu0 0.0
          %1209 = vmatprep.subr.mxu0 0.0
          %1210 = vmatpush1.msra.mxu0 0.0
          %1211 = vmatprep.subr.mxu0 0.0
          %1212 = vmatpush1.msra.mxu0 0.0
          %1213 = vmatprep.subr.mxu0 0.0
          %1214 = vmatpush1.msra.mxu0 0.0
          %1215 = vmatprep.subr.mxu0 0.0
          %1216 = vmatpush1.msra.mxu0 0.0
          %1217 = vmatprep.subr.mxu0 0.0
          %1218 = vmatpush1.msra.mxu0 0.0
          %1219 = vmatprep.subr.mxu0 0.0
          %1220 = vmatpush1.msra.mxu0 0.0
          %1221 = vmatprep.subr.mxu0 0.0
          %1222 = vmatpush1.msra.mxu0 0.0
          %1223 = vmatprep.subr.mxu0 0.0
          %1224 = vmatpush1.msra.mxu0 0.0
          %1225 = vmatprep.subr.mxu0 0.0
          %1226 = vmatpush1.msra.mxu0 0.0
          %1227 = vmatprep.subr.mxu0 0.0
          %1228 = vmatpush1.msra.mxu0 0.0
          %1229 = vmatprep.subr.mxu0 0.0
          %1230 = vmatpush1.msra.mxu0 0.0
          %1231 = vmatprep.subr.mxu0 0.0
          %1232 = vmatpush1.msra.mxu0 0.0
          %1233 = vmatprep.subr.mxu0 0.0
          %1234 = vmatpush1.msra.mxu0 0.0
          %1235 = vmatprep.subr.mxu0 0.0
          %1236 = vmatpush1.msra.mxu0 0.0
          %1237 = vmatprep.subr.mxu0 0.0
          %1238 = vmatpush1.msra.mxu0 0.0
          %1239 = vmatprep.subr.mxu0 0.0
          %1240 = vmatpush1.msra.mxu0 0.0
          %1241 = vmatprep.subr.mxu0 0.0
          %1242 = vmatpush1.msra.mxu0 0.0
          %1243 = vmatprep.subr.mxu0 0.0
          %1244 = vmatpush1.msra.mxu0 0.0
          %1245 = vmatprep.subr.mxu0 0.0
          %1246 = vmatpush1.msra.mxu0 0.0
          %1247 = vmatprep.subr.mxu0 0.0
          %1248 = vmatpush1.msra.mxu0 0.0
          %1249 = vmatprep.subr.mxu0 0.0
          %1250 = vmatpush1.msra.mxu0 0.0
          %1251 = vmatprep.subr.mxu0 0.0
          %1252 = vmatpush1.msra.mxu0 0.0
          %1253 = vmatprep.subr.mxu0 0.0
          %1254 = vmatpush1.msra.mxu0 0.0
          %1255 = vmatprep.subr.mxu0 0.0
          %1256 = vmatpush1.msra.mxu0 0.0
          %1257 = vmatprep.subr.mxu0 0.0
          %1258 = vmatpush1.msra.mxu0 0.0
          %1259 = vmatprep.mubr.f32.mxu0 0.0
          %1260 = vmatmul.mubr.f32.gmra.mrb[0].mxu0 %v1148
          %v1261 = vpop.f32.mrb[0].mxu0
          %v1262 = vadd.f32 %v1069, %v1261
          %v1263 = vpop.f32.mrb[0].mxu0
          %1264 = vmatprep.mubr.f32.mxu0 0.0
          %1265 = vmatmul.mubr.f32.gmra.mrb[0].mxu0 %v1151
          %v1266 = vpop.f32.mrb[0].mxu0
          %v1267 = vadd.f32 %v1074, %v1266
          %v1268 = vpop.f32.mrb[0].mxu0
          %1269 = vmatprep.mubr.f32.mxu0 0.0
          %1270 = vmatmul.mubr.f32.gmra.mrb[0].mxu0 %v1154
          %v1271 = vpop.f32.mrb[0].mxu0
          %v1272 = vadd.f32 %v1079, %v1271
          %v1273 = vpop.f32.mrb[0].mxu0
          %1274 = vmatprep.mubr.f32.mxu0 0.0
          %1275 = vmatmul.mubr.f32.gmra.mrb[0].mxu0 %v1157
          %v1276 = vpop.f32.mrb[0].mxu0
          %v1277 = vadd.f32 %v1084, %v1276
          %v1278 = vpop.f32.mrb[0].mxu0
          %1279 = vmatprep.mubr.f32.mxu0 0.0
          %1280 = vmatmul.mubr.f32.gmra.mrb[0].mxu0 %v1160
          %v1281 = vpop.f32.mrb[0].mxu0
          %v1282 = vadd.f32 %v1089, %v1281
          %v1283 = vpop.f32.mrb[0].mxu0
          %1284 = vmatprep.mubr.f32.mxu0 0.0
          %1285 = vmatmul.mubr.f32.gmra.mrb[0].mxu0 %v1163
          %v1286 = vpop.f32.mrb[0].mxu0
          %v1287 = vadd.f32 %v1094, %v1286
          %v1288 = vpop.f32.mrb[0].mxu0
          %1289 = vmatprep.mubr.f32.mxu0 0.0
          %1290 = vmatmul.mubr.f32.gmra.mrb[0].mxu0 %v1166
          %v1291 = vpop.f32.mrb[0].mxu0
          %v1292 = vadd.f32 %v1099, %v1291
          %v1293 = vpop.f32.mrb[0].mxu0
          %1294 = vmatprep.mubr.f32.mxu0 0.0
          %1295 = vmatmul.mubr.f32.gmra.mrb[0].mxu0 %v1169
          %v1296 = vpop.f32.mrb[0].mxu0
          %v1297 = vadd.f32 %v1104, %v1296
          %v1298 = vpop.f32.mrb[0].mxu0
          %1299 = vmatprep.mubr.f32.mxu0 0.0
          %1300 = vmatmul.mubr.f32.gmra.mrb[0].mxu0 %v1172
          %v1301 = vpop.f32.mrb[0].mxu0
          %v1302 = vadd.f32 %v1109, %v1301
          %v1303 = vpop.f32.mrb[0].mxu0
          %1304 = vmatprep.mubr.f32.mxu0 0.0
          %1305 = vmatmul.mubr.f32.gmra.mrb[0].mxu0 %v1175
          %v1306 = vpop.f32.mrb[0].mxu0
          %v1307 = vadd.f32 %v1114, %v1306
          %v1308 = vpop.f32.mrb[0].mxu0
          %1309 = vmatprep.mubr.f32.mxu0 0.0
          %1310 = vmatmul.mubr.f32.gmra.mrb[0].mxu0 %v1178
          %v1311 = vpop.f32.mrb[0].mxu0
          %v1312 = vadd.f32 %v1119, %v1311
          %v1313 = vpop.f32.mrb[0].mxu0
          %1314 = vmatprep.mubr.f32.mxu0 0.0
          %1315 = vmatmul.mubr.f32.gmra.mrb[0].mxu0 %v1181
          %v1316 = vpop.f32.mrb[0].mxu0
          %v1317 = vadd.f32 %v1124, %v1316
          %v1318 = vpop.f32.mrb[0].mxu0
          %1319 = vmatprep.mubr.f32.mxu0 0.0
          %1320 = vmatmul.mubr.f32.gmra.mrb[0].mxu0 %v1184
          %v1321 = vpop.f32.mrb[0].mxu0
          %v1322 = vadd.f32 %v1129, %v1321
          %v1323 = vpop.f32.mrb[0].mxu0
          %1324 = vmatprep.mubr.f32.mxu0 0.0
          %1325 = vmatmul.mubr.f32.gmra.mrb[0].mxu0 %v1187
          %v1326 = vpop.f32.mrb[0].mxu0
          %v1327 = vadd.f32 %v1134, %v1326
          %v1328 = vpop.f32.mrb[0].mxu0
          %1329 = vmatprep.mubr.f32.mxu0 0.0
          %1330 = vmatmul.mubr.f32.gmra.mrb[0].mxu0 %v1190
          %v1331 = vpop.f32.mrb[0].mxu0
          %v1332 = vadd.f32 %v1139, %v1331
          %v1333 = vpop.f32.mrb[0].mxu0
          %1334 = vmatprep.mubr.f32.mxu0 0.0
          %1335 = vmatmul.mubr.f32.gmra.mrb[0].mxu0 %v1193
          %v1336 = vpop.f32.mrb[0].mxu0
          %v1337 = vadd.f32 %v1144, %v1336
          %v1338 = vpop.f32.mrb[0].mxu0
          %1339 = vdwg.mxu0
          %s1340 = scalar_lea.vmem [#allocation9], %s169
          %v1341 = vld [vmem:[%s1340] sm:$0xff]
          %v1342 = vld [vmem:[%s1340 + $0x8] sm:$0xff]
          %v1343 = vld [vmem:[%s1340 + $0x10] sm:$0xff]
          %v1344 = vld [vmem:[%s1340 + $0x18] sm:$0xff]
          %v1345 = vld [vmem:[%s1340 + $0x20] sm:$0xff]
          %v1346 = vld [vmem:[%s1340 + $0x28] sm:$0xff]
          %v1347 = vld [vmem:[%s1340 + $0x30] sm:$0xff]
          %v1348 = vld [vmem:[%s1340 + $0x38] sm:$0xff]
          %v1349 = vld [vmem:[%s1340 + $0x40] sm:$0xff]
          %v1350 = vld [vmem:[%s1340 + $0x48] sm:$0xff]
          %v1351 = vld [vmem:[%s1340 + $0x50] sm:$0xff]
          %v1352 = vld [vmem:[%s1340 + $0x58] sm:$0xff]
          %v1353 = vld [vmem:[%s1340 + $0x60] sm:$0xff]
          %v1354 = vld [vmem:[%s1340 + $0x68] sm:$0xff]
          %v1355 = vld [vmem:[%s1340 + $0x70] sm:$0xff]
          %v1356 = vld [vmem:[%s1340 + $0x78] sm:$0xff]
          %v1357 = vadd.f32 %v1341, %v1262
          %v1358 = vadd.f32 %v1342, %v1267
          %v1359 = vadd.f32 %v1343, %v1272
          %v1360 = vadd.f32 %v1344, %v1277
          %v1361 = vadd.f32 %v1345, %v1282
          %v1362 = vadd.f32 %v1346, %v1287
          %v1363 = vadd.f32 %v1347, %v1292
          %v1364 = vadd.f32 %v1348, %v1297
          %v1365 = vadd.f32 %v1349, %v1302
          %v1366 = vadd.f32 %v1350, %v1307
          %v1367 = vadd.f32 %v1351, %v1312
          %v1368 = vadd.f32 %v1352, %v1317
          %v1369 = vadd.f32 %v1353, %v1322
          %v1370 = vadd.f32 %v1354, %v1327
          %v1371 = vadd.f32 %v1355, %v1332
          %v1372 = vadd.f32 %v1356, %v1337
          %1373 = vst [vmem:[%s1340] sm:$0xff] %v1357
          %1374 = vst [vmem:[%s1340 + $0x8] sm:$0xff] %v1358
          %1375 = vst [vmem:[%s1340 + $0x10] sm:$0xff] %v1359
          %1376 = vst [vmem:[%s1340 + $0x18] sm:$0xff] %v1360
          %1377 = vst [vmem:[%s1340 + $0x20] sm:$0xff] %v1361
          %1378 = vst [vmem:[%s1340 + $0x28] sm:$0xff] %v1362
          %1379 = vst [vmem:[%s1340 + $0x30] sm:$0xff] %v1363
          %1380 = vst [vmem:[%s1340 + $0x38] sm:$0xff] %v1364
          %1381 = vst [vmem:[%s1340 + $0x40] sm:$0xff] %v1365
          %1382 = vst [vmem:[%s1340 + $0x48] sm:$0xff] %v1366
          %1383 = vst [vmem:[%s1340 + $0x50] sm:$0xff] %v1367
          %1384 = vst [vmem:[%s1340 + $0x58] sm:$0xff] %v1368
          %1385 = vst [vmem:[%s1340 + $0x60] sm:$0xff] %v1369
          %1386 = vst [vmem:[%s1340 + $0x68] sm:$0xff] %v1370
          %1387 = vst [vmem:[%s1340 + $0x70] sm:$0xff] %v1371
          %1388 = vst [vmem:[%s1340 + $0x78] sm:$0xff] %v1372
        $region90: #{tpu_custom_call.1} parent=27 // pred_fallthru
          _
        %p1389 = scmp.eq.s32.totalorder %s22, 1
        // Predicated region
        $region91: #{tpu_custom_call.1} parent=27 // pred_check
          %p1390 = pneg %p1389
        $region92: #{tpu_custom_call.1} parent=27 // pred_check_branch
          %1392 = sbr.rel (%p1390) target = $region94
        $region93: #{tpu_custom_call.1} parent=27 // pred_region
          %s1393 = scalar_lea.vmem [#allocation5], %s170
          %v1394 = vld [vmem:[%s1393] sm:$0xff]
          %v1395 = vld [vmem:[%s1393 + $0x8] sm:$0xff]
          %v1396 = vld [vmem:[%s1393 + $0x10] sm:$0xff]
          %v1397 = vld [vmem:[%s1393 + $0x18] sm:$0xff]
          %v1398 = vld [vmem:[%s1393 + $0x20] sm:$0xff]
          %v1399 = vld [vmem:[%s1393 + $0x28] sm:$0xff]
          %v1400 = vld [vmem:[%s1393 + $0x30] sm:$0xff]
          %v1401 = vld [vmem:[%s1393 + $0x38] sm:$0xff]
          %v1402 = vld [vmem:[%s1393 + $0x40] sm:$0xff]
          %v1403 = vld [vmem:[%s1393 + $0x48] sm:$0xff]
          %v1404 = vld [vmem:[%s1393 + $0x50] sm:$0xff]
          %v1405 = vld [vmem:[%s1393 + $0x58] sm:$0xff]
          %v1406 = vld [vmem:[%s1393 + $0x60] sm:$0xff]
          %v1407 = vld [vmem:[%s1393 + $0x68] sm:$0xff]
          %v1408 = vld [vmem:[%s1393 + $0x70] sm:$0xff]
          %v1409 = vld [vmem:[%s1393 + $0x78] sm:$0xff]
          %vm1410 = vcmp.gt.f32.partialorder %v1394, 0.0
          %vm1411 = vcmp.gt.f32.partialorder %v1395, 0.0
          %vm1412 = vcmp.gt.f32.partialorder %v1396, 0.0
          %vm1413 = vcmp.gt.f32.partialorder %v1397, 0.0
          %vm1414 = vcmp.gt.f32.partialorder %v1398, 0.0
          %vm1415 = vcmp.gt.f32.partialorder %v1399, 0.0
          %vm1416 = vcmp.gt.f32.partialorder %v1400, 0.0
          %vm1417 = vcmp.gt.f32.partialorder %v1401, 0.0
          %vm1418 = vcmp.gt.f32.partialorder %v1402, 0.0
          %vm1419 = vcmp.gt.f32.partialorder %v1403, 0.0
          %vm1420 = vcmp.gt.f32.partialorder %v1404, 0.0
          %vm1421 = vcmp.gt.f32.partialorder %v1405, 0.0
          %vm1422 = vcmp.gt.f32.partialorder %v1406, 0.0
          %vm1423 = vcmp.gt.f32.partialorder %v1407, 0.0
          %vm1424 = vcmp.gt.f32.partialorder %v1408, 0.0
          %vm1425 = vcmp.gt.f32.partialorder %v1409, 0.0
          %v1426 = vmax.f32 %v1394, 1.0
          %v1427 = vmax.f32 %v1395, 1.0
          %v1428 = vmax.f32 %v1396, 1.0
          %v1429 = vmax.f32 %v1397, 1.0
          %v1430 = vmax.f32 %v1398, 1.0
          %v1431 = vmax.f32 %v1399, 1.0
          %v1432 = vmax.f32 %v1400, 1.0
          %v1433 = vmax.f32 %v1401, 1.0
          %v1434 = vmax.f32 %v1402, 1.0
          %v1435 = vmax.f32 %v1403, 1.0
          %v1436 = vmax.f32 %v1404, 1.0
          %v1437 = vmax.f32 %v1405, 1.0
          %v1438 = vmax.f32 %v1406, 1.0
          %v1439 = vmax.f32 %v1407, 1.0
          %v1440 = vmax.f32 %v1408, 1.0
          %v1441 = vmax.f32 %v1409, 1.0
          %v1442 = vrcp.pop %v1426
          %v1443 = vmul.f32 1.0, %v1442
          %v1444 = vrcp.pop %v1427
          %v1445 = vmul.f32 1.0, %v1444
          %v1446 = vrcp.pop %v1428
          %v1447 = vmul.f32 1.0, %v1446
          %v1448 = vrcp.pop %v1429
          %v1449 = vmul.f32 1.0, %v1448
          %v1450 = vrcp.pop %v1430
          %v1451 = vmul.f32 1.0, %v1450
          %v1452 = vrcp.pop %v1431
          %v1453 = vmul.f32 1.0, %v1452
          %v1454 = vrcp.pop %v1432
          %v1455 = vmul.f32 1.0, %v1454
          %v1456 = vrcp.pop %v1433
          %v1457 = vmul.f32 1.0, %v1456
          %v1458 = vrcp.pop %v1434
          %v1459 = vmul.f32 1.0, %v1458
          %v1460 = vrcp.pop %v1435
          %v1461 = vmul.f32 1.0, %v1460
          %v1462 = vrcp.pop %v1436
          %v1463 = vmul.f32 1.0, %v1462
          %v1464 = vrcp.pop %v1437
          %v1465 = vmul.f32 1.0, %v1464
          %v1466 = vrcp.pop %v1438
          %v1467 = vmul.f32 1.0, %v1466
          %v1468 = vrcp.pop %v1439
          %v1469 = vmul.f32 1.0, %v1468
          %v1470 = vrcp.pop %v1440
          %v1471 = vmul.f32 1.0, %v1470
          %v1472 = vrcp.pop %v1441
          %v1473 = vmul.f32 1.0, %v1472
          %v1474 = vsel %vm1410, %v1443, 0.0
          %v1475 = vsel %vm1411, %v1445, 0.0
          %v1476 = vsel %vm1412, %v1447, 0.0
          %v1477 = vsel %vm1413, %v1449, 0.0
          %v1478 = vsel %vm1414, %v1451, 0.0
          %v1479 = vsel %vm1415, %v1453, 0.0
          %v1480 = vsel %vm1416, %v1455, 0.0
          %v1481 = vsel %vm1417, %v1457, 0.0
          %v1482 = vsel %vm1418, %v1459, 0.0
          %v1483 = vsel %vm1419, %v1461, 0.0
          %v1484 = vsel %vm1420, %v1463, 0.0
          %v1485 = vsel %vm1421, %v1465, 0.0
          %v1486 = vsel %vm1422, %v1467, 0.0
          %v1487 = vsel %vm1423, %v1469, 0.0
          %v1488 = vsel %vm1424, %v1471, 0.0
          %v1489 = vsel %vm1425, %v1473, 0.0
          %1491 = vset.pattern.permute.xlu0 0
          %1492 = vperm.xlu0 %1491, %v1474
          %v1493 = vpop.permute.xlu0 %1492
          %1496 = vset.pattern.permute.xlu0 0
          %1497 = vperm.xlu0 %1496, %v1475
          %v1498 = vpop.permute.xlu0 %1497
          %1501 = vset.pattern.permute.xlu0 0
          %1502 = vperm.xlu0 %1501, %v1476
          %v1503 = vpop.permute.xlu0 %1502
          %1506 = vset.pattern.permute.xlu0 0
          %1507 = vperm.xlu0 %1506, %v1477
          %v1508 = vpop.permute.xlu0 %1507
          %1511 = vset.pattern.permute.xlu0 0
          %1512 = vperm.xlu0 %1511, %v1478
          %v1513 = vpop.permute.xlu0 %1512
          %1516 = vset.pattern.permute.xlu0 0
          %1517 = vperm.xlu0 %1516, %v1479
          %v1518 = vpop.permute.xlu0 %1517
          %1521 = vset.pattern.permute.xlu0 0
          %1522 = vperm.xlu0 %1521, %v1480
          %v1523 = vpop.permute.xlu0 %1522
          %1526 = vset.pattern.permute.xlu0 0
          %1527 = vperm.xlu0 %1526, %v1481
          %v1528 = vpop.permute.xlu0 %1527
          %1531 = vset.pattern.permute.xlu0 0
          %1532 = vperm.xlu0 %1531, %v1482
          %v1533 = vpop.permute.xlu0 %1532
          %1536 = vset.pattern.permute.xlu0 0
          %1537 = vperm.xlu0 %1536, %v1483
          %v1538 = vpop.permute.xlu0 %1537
          %1541 = vset.pattern.permute.xlu0 0
          %1542 = vperm.xlu0 %1541, %v1484
          %v1543 = vpop.permute.xlu0 %1542
          %1546 = vset.pattern.permute.xlu0 0
          %1547 = vperm.xlu0 %1546, %v1485
          %v1548 = vpop.permute.xlu0 %1547
          %1551 = vset.pattern.permute.xlu0 0
          %1552 = vperm.xlu0 %1551, %v1486
          %v1553 = vpop.permute.xlu0 %1552
          %1556 = vset.pattern.permute.xlu0 0
          %1557 = vperm.xlu0 %1556, %v1487
          %v1558 = vpop.permute.xlu0 %1557
          %1561 = vset.pattern.permute.xlu0 0
          %1562 = vperm.xlu0 %1561, %v1488
          %v1563 = vpop.permute.xlu0 %1562
          %1566 = vset.pattern.permute.xlu0 0
          %1567 = vperm.xlu0 %1566, %v1489
          %v1568 = vpop.permute.xlu0 %1567
          %v1570 = vmul.f32 %v1394, %v1493
          %v1571 = vmul.f32 %v1395, %v1498
          %v1572 = vmul.f32 %v1396, %v1503
          %v1573 = vmul.f32 %v1397, %v1508
          %v1574 = vmul.f32 %v1398, %v1513
          %v1575 = vmul.f32 %v1399, %v1518
          %v1576 = vmul.f32 %v1400, %v1523
          %v1577 = vmul.f32 %v1401, %v1528
          %v1578 = vmul.f32 %v1402, %v1533
          %v1579 = vmul.f32 %v1403, %v1538
          %v1580 = vmul.f32 %v1404, %v1543
          %v1581 = vmul.f32 %v1405, %v1548
          %v1582 = vmul.f32 %v1406, %v1553
          %v1583 = vmul.f32 %v1407, %v1558
          %v1584 = vmul.f32 %v1408, %v1563
          %v1585 = vmul.f32 %v1409, %v1568
          %v1586 = vld [vmem:[%s2 + $0x50] sm:$0xff]
          %v1587 = vld [vmem:[%s2 + $0x58] sm:$0xff]
          %v1588 = vld [vmem:[%s2 + $0x60] sm:$0xff]
          %v1589 = vld [vmem:[%s2 + $0x68] sm:$0xff]
          %v1590 = vld [vmem:[%s2 + $0x70] sm:$0xff]
          %s1591 = scalar_lea.vmem [#allocation9], %s170
          %v1592 = vld [vmem:[%s1591] sm:$0xff]
          %v1593 = vld [vmem:[%s1591 + $0x8] sm:$0xff]
          %v1594 = vld [vmem:[%s1591 + $0x10] sm:$0xff]
          %v1595 = vld [vmem:[%s1591 + $0x18] sm:$0xff]
          %v1596 = vld [vmem:[%s1591 + $0x20] sm:$0xff]
          %v1597 = vld [vmem:[%s1591 + $0x28] sm:$0xff]
          %v1598 = vld [vmem:[%s1591 + $0x30] sm:$0xff]
          %v1599 = vld [vmem:[%s1591 + $0x38] sm:$0xff]
          %v1600 = vld [vmem:[%s1591 + $0x40] sm:$0xff]
          %v1601 = vld [vmem:[%s1591 + $0x48] sm:$0xff]
          %v1602 = vld [vmem:[%s1591 + $0x50] sm:$0xff]
          %v1603 = vld [vmem:[%s1591 + $0x58] sm:$0xff]
          %v1604 = vld [vmem:[%s1591 + $0x60] sm:$0xff]
          %v1605 = vld [vmem:[%s1591 + $0x68] sm:$0xff]
          %v1606 = vld [vmem:[%s1591 + $0x70] sm:$0xff]
          %v1607 = vld [vmem:[%s1591 + $0x78] sm:$0xff]
          %vm1608 = vcmask 326656
          %v1610 = vsel %vm1608, %v1570, 0
          %v1613 = vsel %vm1608, %v1571, 0
          %v1616 = vsel %vm1608, %v1572, 0
          %v1619 = vsel %vm1608, %v1573, 0
          %v1622 = vsel %vm1608, %v1574, 0
          %v1625 = vsel %vm1608, %v1575, 0
          %v1628 = vsel %vm1608, %v1576, 0
          %v1631 = vsel %vm1608, %v1577, 0
          %v1634 = vsel %vm1608, %v1578, 0
          %v1637 = vsel %vm1608, %v1579, 0
          %v1640 = vsel %vm1608, %v1580, 0
          %v1643 = vsel %vm1608, %v1581, 0
          %v1646 = vsel %vm1608, %v1582, 0
          %v1649 = vsel %vm1608, %v1583, 0
          %v1652 = vsel %vm1608, %v1584, 0
          %v1655 = vsel %vm1608, %v1585, 0
          %1657 = vmatprep.subr.mxu0 0.0
          %1658 = vmatpush1.msra.mxu0 %v1586
          %1659 = vmatprep.subr.mxu0 0.0
          %1660 = vmatpush1.msra.mxu0 %v1587
          %1661 = vmatprep.subr.mxu0 0.0
          %1662 = vmatpush1.msra.mxu0 %v1588
          %1663 = vmatprep.subr.mxu0 0.0
          %1664 = vmatpush1.msra.mxu0 %v1589
          %1665 = vmatprep.subr.mxu0 0.0
          %1666 = vmatpush1.msra.mxu0 %v1590
          %1667 = vmatprep.subr.mxu0 0.0
          %1668 = vmatpush1.msra.mxu0 0.0
          %1669 = vmatprep.subr.mxu0 0.0
          %1670 = vmatpush1.msra.mxu0 0.0
          %1671 = vmatprep.subr.mxu0 0.0
          %1672 = vmatpush1.msra.mxu0 0.0
          %1673 = vmatprep.subr.mxu0 0.0
          %1674 = vmatpush1.msra.mxu0 0.0
          %1675 = vmatprep.subr.mxu0 0.0
          %1676 = vmatpush1.msra.mxu0 0.0
          %1677 = vmatprep.subr.mxu0 0.0
          %1678 = vmatpush1.msra.mxu0 0.0
          %1679 = vmatprep.subr.mxu0 0.0
          %1680 = vmatpush1.msra.mxu0 0.0
          %1681 = vmatprep.subr.mxu0 0.0
          %1682 = vmatpush1.msra.mxu0 0.0
          %1683 = vmatprep.subr.mxu0 0.0
          %1684 = vmatpush1.msra.mxu0 0.0
          %1685 = vmatprep.subr.mxu0 0.0
          %1686 = vmatpush1.msra.mxu0 0.0
          %1687 = vmatprep.subr.mxu0 0.0
          %1688 = vmatpush1.msra.mxu0 0.0
          %1689 = vmatprep.subr.mxu0 0.0
          %1690 = vmatpush1.msra.mxu0 0.0
          %1691 = vmatprep.subr.mxu0 0.0
          %1692 = vmatpush1.msra.mxu0 0.0
          %1693 = vmatprep.subr.mxu0 0.0
          %1694 = vmatpush1.msra.mxu0 0.0
          %1695 = vmatprep.subr.mxu0 0.0
          %1696 = vmatpush1.msra.mxu0 0.0
          %1697 = vmatprep.subr.mxu0 0.0
          %1698 = vmatpush1.msra.mxu0 0.0
          %1699 = vmatprep.subr.mxu0 0.0
          %1700 = vmatpush1.msra.mxu0 0.0
          %1701 = vmatprep.subr.mxu0 0.0
          %1702 = vmatpush1.msra.mxu0 0.0
          %1703 = vmatprep.subr.mxu0 0.0
          %1704 = vmatpush1.msra.mxu0 0.0
          %1705 = vmatprep.subr.mxu0 0.0
          %1706 = vmatpush1.msra.mxu0 0.0
          %1707 = vmatprep.subr.mxu0 0.0
          %1708 = vmatpush1.msra.mxu0 0.0
          %1709 = vmatprep.subr.mxu0 0.0
          %1710 = vmatpush1.msra.mxu0 0.0
          %1711 = vmatprep.subr.mxu0 0.0
          %1712 = vmatpush1.msra.mxu0 0.0
          %1713 = vmatprep.subr.mxu0 0.0
          %1714 = vmatpush1.msra.mxu0 0.0
          %1715 = vmatprep.subr.mxu0 0.0
          %1716 = vmatpush1.msra.mxu0 0.0
          %1717 = vmatprep.subr.mxu0 0.0
          %1718 = vmatpush1.msra.mxu0 0.0
          %1719 = vmatprep.subr.mxu0 0.0
          %1720 = vmatpush1.msra.mxu0 0.0
          %1721 = vmatprep.mubr.f32.mxu0 0.0
          %1722 = vmatmul.mubr.f32.gmra.mrb[0].mxu0 %v1610
          %v1723 = vpop.f32.mrb[0].mxu0
          %v1724 = vadd.f32 0.0, %v1723
          %v1725 = vpop.f32.mrb[0].mxu0
          %1726 = vmatprep.mubr.f32.mxu0 0.0
          %1727 = vmatmul.mubr.f32.gmra.mrb[0].mxu0 %v1613
          %v1728 = vpop.f32.mrb[0].mxu0
          %v1729 = vadd.f32 0.0, %v1728
          %v1730 = vpop.f32.mrb[0].mxu0
          %1731 = vmatprep.mubr.f32.mxu0 0.0
          %1732 = vmatmul.mubr.f32.gmra.mrb[0].mxu0 %v1616
          %v1733 = vpop.f32.mrb[0].mxu0
          %v1734 = vadd.f32 0.0, %v1733
          %v1735 = vpop.f32.mrb[0].mxu0
          %1736 = vmatprep.mubr.f32.mxu0 0.0
          %1737 = vmatmul.mubr.f32.gmra.mrb[0].mxu0 %v1619
          %v1738 = vpop.f32.mrb[0].mxu0
          %v1739 = vadd.f32 0.0, %v1738
          %v1740 = vpop.f32.mrb[0].mxu0
          %1741 = vmatprep.mubr.f32.mxu0 0.0
          %1742 = vmatmul.mubr.f32.gmra.mrb[0].mxu0 %v1622
          %v1743 = vpop.f32.mrb[0].mxu0
          %v1744 = vadd.f32 0.0, %v1743
          %v1745 = vpop.f32.mrb[0].mxu0
          %1746 = vmatprep.mubr.f32.mxu0 0.0
          %1747 = vmatmul.mubr.f32.gmra.mrb[0].mxu0 %v1625
          %v1748 = vpop.f32.mrb[0].mxu0
          %v1749 = vadd.f32 0.0, %v1748
          %v1750 = vpop.f32.mrb[0].mxu0
          %1751 = vmatprep.mubr.f32.mxu0 0.0
          %1752 = vmatmul.mubr.f32.gmra.mrb[0].mxu0 %v1628
          %v1753 = vpop.f32.mrb[0].mxu0
          %v1754 = vadd.f32 0.0, %v1753
          %v1755 = vpop.f32.mrb[0].mxu0
          %1756 = vmatprep.mubr.f32.mxu0 0.0
          %1757 = vmatmul.mubr.f32.gmra.mrb[0].mxu0 %v1631
          %v1758 = vpop.f32.mrb[0].mxu0
          %v1759 = vadd.f32 0.0, %v1758
          %v1760 = vpop.f32.mrb[0].mxu0
          %1761 = vmatprep.mubr.f32.mxu0 0.0
          %1762 = vmatmul.mubr.f32.gmra.mrb[0].mxu0 %v1634
          %v1763 = vpop.f32.mrb[0].mxu0
          %v1764 = vadd.f32 0.0, %v1763
          %v1765 = vpop.f32.mrb[0].mxu0
          %1766 = vmatprep.mubr.f32.mxu0 0.0
          %1767 = vmatmul.mubr.f32.gmra.mrb[0].mxu0 %v1637
          %v1768 = vpop.f32.mrb[0].mxu0
          %v1769 = vadd.f32 0.0, %v1768
          %v1770 = vpop.f32.mrb[0].mxu0
          %1771 = vmatprep.mubr.f32.mxu0 0.0
          %1772 = vmatmul.mubr.f32.gmra.mrb[0].mxu0 %v1640
          %v1773 = vpop.f32.mrb[0].mxu0
          %v1774 = vadd.f32 0.0, %v1773
          %v1775 = vpop.f32.mrb[0].mxu0
          %1776 = vmatprep.mubr.f32.mxu0 0.0
          %1777 = vmatmul.mubr.f32.gmra.mrb[0].mxu0 %v1643
          %v1778 = vpop.f32.mrb[0].mxu0
          %v1779 = vadd.f32 0.0, %v1778
          %v1780 = vpop.f32.mrb[0].mxu0
          %1781 = vmatprep.mubr.f32.mxu0 0.0
          %1782 = vmatmul.mubr.f32.gmra.mrb[0].mxu0 %v1646
          %v1783 = vpop.f32.mrb[0].mxu0
          %v1784 = vadd.f32 0.0, %v1783
          %v1785 = vpop.f32.mrb[0].mxu0
          %1786 = vmatprep.mubr.f32.mxu0 0.0
          %1787 = vmatmul.mubr.f32.gmra.mrb[0].mxu0 %v1649
          %v1788 = vpop.f32.mrb[0].mxu0
          %v1789 = vadd.f32 0.0, %v1788
          %v1790 = vpop.f32.mrb[0].mxu0
          %1791 = vmatprep.mubr.f32.mxu0 0.0
          %1792 = vmatmul.mubr.f32.gmra.mrb[0].mxu0 %v1652
          %v1793 = vpop.f32.mrb[0].mxu0
          %v1794 = vadd.f32 0.0, %v1793
          %v1795 = vpop.f32.mrb[0].mxu0
          %1796 = vmatprep.mubr.f32.mxu0 0.0
          %1797 = vmatmul.mubr.f32.gmra.mrb[0].mxu0 %v1655
          %v1798 = vpop.f32.mrb[0].mxu0
          %v1799 = vadd.f32 0.0, %v1798
          %v1800 = vpop.f32.mrb[0].mxu0
          %1801 = vdwg.mxu0
          %v1802 = vadd.f32 %v1592, %v1724
          %v1803 = vadd.f32 %v1593, %v1729
          %v1804 = vadd.f32 %v1594, %v1734
          %v1805 = vadd.f32 %v1595, %v1739
          %v1806 = vadd.f32 %v1596, %v1744
          %v1807 = vadd.f32 %v1597, %v1749
          %v1808 = vadd.f32 %v1598, %v1754
          %v1809 = vadd.f32 %v1599, %v1759
          %v1810 = vadd.f32 %v1600, %v1764
          %v1811 = vadd.f32 %v1601, %v1769
          %v1812 = vadd.f32 %v1602, %v1774
          %v1813 = vadd.f32 %v1603, %v1779
          %v1814 = vadd.f32 %v1604, %v1784
          %v1815 = vadd.f32 %v1605, %v1789
          %v1816 = vadd.f32 %v1606, %v1794
          %v1817 = vadd.f32 %v1607, %v1799
          %1818 = vst [vmem:[%s1591] sm:$0xff] %v1802
          %1819 = vst [vmem:[%s1591 + $0x8] sm:$0xff] %v1803
          %1820 = vst [vmem:[%s1591 + $0x10] sm:$0xff] %v1804
          %1821 = vst [vmem:[%s1591 + $0x18] sm:$0xff] %v1805
          %1822 = vst [vmem:[%s1591 + $0x20] sm:$0xff] %v1806
          %1823 = vst [vmem:[%s1591 + $0x28] sm:$0xff] %v1807
          %1824 = vst [vmem:[%s1591 + $0x30] sm:$0xff] %v1808
          %1825 = vst [vmem:[%s1591 + $0x38] sm:$0xff] %v1809
          %1826 = vst [vmem:[%s1591 + $0x40] sm:$0xff] %v1810
          %1827 = vst [vmem:[%s1591 + $0x48] sm:$0xff] %v1811
          %1828 = vst [vmem:[%s1591 + $0x50] sm:$0xff] %v1812
          %1829 = vst [vmem:[%s1591 + $0x58] sm:$0xff] %v1813
          %1830 = vst [vmem:[%s1591 + $0x60] sm:$0xff] %v1814
          %1831 = vst [vmem:[%s1591 + $0x68] sm:$0xff] %v1815
          %1832 = vst [vmem:[%s1591 + $0x70] sm:$0xff] %v1816
          %1833 = vst [vmem:[%s1591 + $0x78] sm:$0xff] %v1817
        $region94: #{tpu_custom_call.1} parent=27 // pred_fallthru
          _
        // Predicated region
        $region95: #{tpu_custom_call.1} parent=27 // pred_check
          %p1834 = pneg %p92
        $region96: #{tpu_custom_call.1} parent=27 // pred_check_branch
          %1836 = sbr.rel (%p1834) target = $region98
        $region97: #{tpu_custom_call.1} parent=27 // pred_region
          %s1838 = ssub.s32 4096, 4096
          %1839 = vsyncadd [#allocation8], %s1838
          %s1840 = sshll.u32 [#allocation9], 4
          %s1841 = int_to_ptr.vmem [resolvable:$true] %s1840
          %1846 = dma.vmem_to_hbm [thread:$0]  %s1841, 4096, %s3, [#allocation8], 128, 128, 8
        $region98: #{tpu_custom_call.1} parent=27 // pred_fallthru
          _
        // Predicated region
        $region99: #{tpu_custom_call.1} parent=27 // pred_check
          %p1847 = pneg %p92
        $region100: #{tpu_custom_call.1} parent=27 // pred_check_branch
          %1849 = sbr.rel (%p1847) target = $region102
        $region101: #{tpu_custom_call.1} parent=27 // pred_region
          %1850 = dma.done [#allocation8], 4096
        $region102: #{tpu_custom_call.1} parent=27 // pred_fallthru
          _
      $region28: #{tpu_custom_call.1} parent=5 // pred_fallthru
        _
      %p1851 = scmp.le.s32.totalorder 2, %s13
      // Predicated region
      $region103: #{tpu_custom_call.1} parent=5 // pred_check
        %p1852 = pneg %p1851
      $region104: #{tpu_custom_call.1} parent=5 // pred_check_branch
        %1854 = sbr.rel (%p1852) target = $region106
      $region105: #{tpu_custom_call.1} parent=5 // pred_region
        %s1855 = ssub.s32 %s13, 2
      $region106: #{tpu_custom_call.1} parent=5 // pred_fallthru
        _
    $region6: #{tpu_custom_call.1} parent=1 // loop_footer
      %s17 = sadd.s32 1, %s13
    $region7: #{tpu_custom_call.1} parent=1 // loop_footer_branch
      %12 = sbr.rel target = $region3
    $region8: #{tpu_custom_call.1} parent=1 // loop_exit
      _
    %1856 = vsyncpa [#allocation7], 1
    %s1857 = scalar_lea.sflag [#allocation7], 1
    %1858 = vsyncpa %s1857, 1
    %1859 = vsyncpa [#allocation8], 1
    %s1860 = scalar_lea.sflag [#allocation8], 1
    %1861 = vsyncpa %s1860, 1
  %1862 = vsyncmov [#allocation3]
  %s1863 = vpop.sfrf %1862
  %p1864 = scmp.eq.s32.totalorder %s1863, 0
  %p1865 = pneg %p1864
  %1867 = shalt.err (%p1865)

</llo_original>
